<compile_context>
chip_gen: v6e
topology: v6e:2x2x1
jax: 0.10.0
libtpu: 0.0.40
codegen_flags: <defaults>
</compile_context>

<pallas_src>
import functools

import jax
import jax.numpy as jnp
from jax.experimental import pallas as pl
from jax.experimental.pallas import tpu as pltpu

LANE = 128
SUBLANE = 8


def _round_up(v, m):
    return ((v + m - 1) // m) * m


# ---------------------------------------------------------------------------
# In-kernel helpers.
# ---------------------------------------------------------------------------
def _causal_conv(h, w_ref, b_ref, hbuf, *, K, dilation, L, off):
    """Dilated causal conv as ONE MXU matmul via im2col.

    h:      (L, Cin) f32 value (current activation)
    w_ref:  (K*Cin, Cout) bf16, tap k occupies rows [k*Cin, (k+1)*Cin)
    b_ref:  (1, Cout) f32
    hbuf:   (off + L, Cmax) f32 VMEM staging buffer; rows [0, off) are zero.
    output[t] = sum_k w[k]^T h[t - (K-1-k)*dilation]   (zero for negative idx)
    """
    cp = h.shape[-1]
    if K == 1:
        im2col = h
    else:
        hbuf[off:off + L, :cp] = h          # 8-aligned store offset
        cols = []
        for k in range(K):
            s = (K - 1 - k) * dilation
            cols.append(h if s == 0 else hbuf[off - s:off - s + L, :cp])
        im2col = jnp.concatenate(cols, axis=-1)        # lane-aligned concat
    acc = jnp.dot(im2col.astype(jnp.bfloat16), w_ref[...],
                  preferred_element_type=jnp.float32)
    return acc + b_ref[...]


def _tcn_stack_kernel(x_ref, *rest, layer_cfgs, K, L, off):
    """Whole TemporalBlock stack for one batch element (fused in VMEM)."""
    hbuf = rest[-1]
    o_ref = rest[-2]
    wrefs = rest[:-2]

    # Zero only the causal-pad rows of the staging buffer; they are never
    # written afterwards, so every shifted tap read sees zeros there.
    if off:
        hbuf[:off, :] = jnp.zeros((off, hbuf.shape[1]), jnp.float32)

    h = x_ref[0].astype(jnp.float32)                       # (L, C0p)
    idx = 0
    for dil, has_ds in layer_cfgs:                         # static Python loop
        w1, b1, w2, b2 = wrefs[idx], wrefs[idx + 1], wrefs[idx + 2], wrefs[idx + 3]
        idx += 4
        if has_ds:
            wds, bds = wrefs[idx], wrefs[idx + 1]
            idx += 2

        x_in = h
        h1 = jnp.maximum(
            _causal_conv(x_in, w1, b1, hbuf, K=K, dilation=dil, L=L, off=off), 0.0)
        h2 = jnp.maximum(
            _causal_conv(h1, w2, b2, hbuf, K=K, dilation=dil, L=L, off=off), 0.0)
        if has_ds:
            res = jnp.dot(x_in.astype(jnp.bfloat16), wds[...],
                          preferred_element_type=jnp.float32) + bds[...]
        else:
            res = x_in
        h = jnp.maximum(h2 + res, 0.0)                     # f32 epilogue

    o_ref[0] = h.astype(o_ref.dtype)


# ---------------------------------------------------------------------------
# One-time parameter preparation (padding / im2col weight reshape).
# ---------------------------------------------------------------------------
def prepare_tcn(params, c_in, kernel_size):
    """Pad weights to lane multiples and fold taps into the contraction dim.

    Done once and reused across every temporal_conv_net call (important for
    the autoregressive head which re-runs the stack predict_window times).
    """
    K = kernel_size
    n_layers = len(params)
    c0p = _round_up(c_in, LANE)

    weight_args = []
    layer_cfgs = []
    flops_per_row = 0
    max_cp = c0p
    cur_c, cur_cp = c_in, c0p

    for i, prm in enumerate(params):
        out_c = int(prm["b1"].shape[0])
        out_cp = _round_up(out_c, LANE)
        max_cp = max(max_cp, out_cp)
        dil = 2 ** i
        has_ds = "wds" in prm

        w1 = jnp.zeros((K, cur_cp, out_cp), jnp.bfloat16)
        w1 = w1.at[:, :cur_c, :out_c].set(prm["w1"].astype(jnp.bfloat16))
        b1 = jnp.zeros((1, out_cp), jnp.float32).at[0, :out_c].set(prm["b1"])
        w2 = jnp.zeros((K, out_cp, out_cp), jnp.bfloat16)
        w2 = w2.at[:, :out_c, :out_c].set(prm["w2"].astype(jnp.bfloat16))
        b2 = jnp.zeros((1, out_cp), jnp.float32).at[0, :out_c].set(prm["b2"])

        weight_args += [w1.reshape(K * cur_cp, out_cp), b1,
                        w2.reshape(K * out_cp, out_cp), b2]
        flops_per_row += 2 * (K * cur_cp + K * out_cp) * out_cp

        if has_ds:
            wds = jnp.zeros((cur_cp, out_cp), jnp.bfloat16)
            wds = wds.at[:cur_c, :out_c].set(prm["wds"].astype(jnp.bfloat16))
            bds = jnp.zeros((1, out_cp), jnp.float32).at[0, :out_c].set(prm["bds"])
            weight_args += [wds, bds]
            flops_per_row += 2 * cur_cp * out_cp

        layer_cfgs.append((dil, has_ds))
        cur_c, cur_cp = out_c, out_cp

    max_pad = (K - 1) * (2 ** (n_layers - 1))
    off = _round_up(max_pad, SUBLANE) if max_pad > 0 else 0

    return dict(K=K, c_in=c_in, c0p=c0p, out_c=cur_c, out_cp=cur_cp,
                max_cp=max_cp, off=off, layer_cfgs=tuple(layer_cfgs),
                weight_args=tuple(weight_args), flops_per_row=flops_per_row)


# ---------------------------------------------------------------------------
# Fused TemporalConvNet forward (PyTorch NCL interface).
# ---------------------------------------------------------------------------
def temporal_conv_net(x_ncl, prepped):
    """x_ncl: (N, C_in, L) f32  ->  (N, C_out_last, L) f32."""
    N, c_in, L = x_ncl.shape
    assert c_in == prepped["c_in"]
    K, off = prepped["K"], prepped["off"]
    c0p, out_c, out_cp = prepped["c0p"], prepped["out_c"], prepped["out_cp"]
    max_cp = prepped["max_cp"]
    weight_args = prepped["weight_args"]

    Lp = _round_up(max(L, SUBLANE), SUBLANE)

    # NCL -> NLC, pad time to 8 sublanes and channels to 128 lanes (exact:
    # padded weights/biases are zero, causal conv ignores the zero time tail).
    x = jnp.transpose(x_ncl, (0, 2, 1)).astype(jnp.float32)
    x_p = jnp.zeros((N, Lp, c0p), jnp.float32).at[:, :L, :c_in].set(x)

    in_specs = [pl.BlockSpec((1, Lp, c0p), lambda n: (n, 0, 0))]
    # All weight/bias operands are 2D and resident across the whole grid.
    in_specs += [pl.BlockSpec(tuple(w.shape), lambda n: (0, 0))
                 for w in weight_args]

    flops = N * Lp * prepped["flops_per_row"]
    w_bytes = sum(int(a.size) * a.dtype.itemsize for a in weight_args)
    bytes_accessed = N * Lp * (c0p + out_cp) * 4 + w_bytes

    # VMEM budget: double-buffered x/out blocks, resident weights, staging
    # buffer, plus in-kernel im2col / accumulator temporaries.
    est = (2 * (Lp * c0p + Lp * out_cp) * 4 + 2 * w_bytes
           + (off + Lp) * max_cp * 4 + 6 * Lp * K * max_cp * 4)
    vmem_limit = int(min(64 * 2 ** 20, max(24 * 2 ** 20, 4 * est)))

    kern = functools.partial(_tcn_stack_kernel, layer_cfgs=prepped["layer_cfgs"],
                             K=K, L=Lp, off=off)

    out_p = pl.pallas_call(
        kern,
        out_shape=jax.ShapeDtypeStruct((N, Lp, out_cp), jnp.float32),
        grid=(N,),
        in_specs=in_specs,
        out_specs=pl.BlockSpec((1, Lp, out_cp), lambda n: (n, 0, 0)),
        scratch_shapes=[pltpu.VMEM((off + Lp, max_cp), jnp.float32)],
        compiler_params=pltpu.CompilerParams(
            dimension_semantics=("parallel",),
            vmem_limit_bytes=vmem_limit),
        cost_estimate=pl.CostEstimate(flops=int(flops), transcendentals=0,
                                      bytes_accessed=int(bytes_accessed)),
    )(x_p, *weight_args)

    return jnp.transpose(out_p[:, :L, :out_c], (0, 2, 1))   # NLC -> NCL


# ---------------------------------------------------------------------------
# TCN.forward (autoregressive head).  The tiny linear head and the context
# shift are plain-JAX glue around the fused Pallas TCN stack.
# ---------------------------------------------------------------------------
def tcn_forward(x_ncl, prepped, lin_w, lin_b, *, predict_window):
    def head(ctx):
        feats = temporal_conv_net(ctx, prepped)
        return feats[..., -1] @ lin_w.T + lin_b              # (N, input_size)

    y = x_ncl[..., -1:] + head(x_ncl)[..., None]
    preds = [y]
    ctx = jnp.concatenate([x_ncl[..., 1:], y], axis=-1)
    for _ in range(predict_window - 1):
        y = y + head(ctx)[..., None]
        ctx = jnp.concatenate([ctx[..., 1:], y], axis=-1)
        preds.append(y)
    return jnp.concatenate(preds, axis=-1)


# ---------------------------------------------------------------------------
# Deterministic parameter init (shapes mirror TemporalConvNet / TCN).
# ---------------------------------------------------------------------------
def init_params(key, num_inputs, num_channels, kernel_size):
    params = []
    for i, out_ch in enumerate(num_channels):
        in_ch = num_inputs if i == 0 else num_channels[i - 1]
        key, k1, k2, k3, k4, k5, k6 = jax.random.split(key, 7)
        prm = {
            "w1": 0.01 * jax.random.normal(k1, (kernel_size, in_ch, out_ch), jnp.float32),
            "b1": 0.01 * jax.random.normal(k2, (out_ch,), jnp.float32),
            "w2": 0.01 * jax.random.normal(k3, (kernel_size, out_ch, out_ch), jnp.float32),
            "b2": 0.01 * jax.random.normal(k4, (out_ch,), jnp.float32),
        }
        if in_ch != out_ch:
            prm["wds"] = 0.01 * jax.random.normal(k5, (in_ch, out_ch), jnp.float32)
            prm["bds"] = 0.01 * jax.random.normal(k6, (out_ch,), jnp.float32)
        params.append(prm)
    return params


# ---------------------------------------------------------------------------
# Plain-JAX references (same bf16-operand / f32-accumulate matmul numerics).
# ---------------------------------------------------------------------------
def _ref_block(x, w1, b1, w2, b2, wds, bds, K, d):
    N, L, _ = x.shape

    def conv(inp, w, b):
        acc = jnp.zeros(inp.shape[:2] + (w.shape[-1],), jnp.float32)
        for k in range(K):
            s = (K - 1 - k) * d
            shifted = jnp.pad(inp, ((0, 0), (s, 0), (0, 0)))[:, :L, :]
            acc = acc + jnp.einsum("nlc,cd->nld",
                                   shifted.astype(jnp.bfloat16),
                                   w[k].astype(jnp.bfloat16),
                                   preferred_element_type=jnp.float32)
        return acc + b.astype(jnp.float32)

    h1 = jax.nn.relu(conv(x, w1, b1))
    h2 = jax.nn.relu(conv(h1, w2, b2))
    if wds is None:
        res = x
    else:
        res = jnp.einsum("nlc,cd->nld", x.astype(jnp.bfloat16),
                         wds.astype(jnp.bfloat16),
                         preferred_element_type=jnp.float32) + bds
    return jax.nn.relu(h2 + res)


def _ref_net(x_ncl, params, kernel_size):
    x = jnp.transpose(x_ncl, (0, 2, 1))
    for i, prm in enumerate(params):
        x = _ref_block(x, prm["w1"], prm["b1"], prm["w2"], prm["b2"],
                       prm.get("wds"), prm.get("bds"), kernel_size, 2 ** i)
    return jnp.transpose(x, (0, 2, 1))


def _ref_tcn_forward(x_ncl, params, lin_w, lin_b, kernel_size, predict_window):
    def head(ctx):
        return _ref_net(ctx, params, kernel_size)[..., -1] @ lin_w.T + lin_b

    y = x_ncl[..., -1:] + head(x_ncl)[..., None]
    preds = [y]
    ctx = jnp.concatenate([x_ncl[..., 1:], y], axis=-1)
    for _ in range(predict_window - 1):
        y = y + head(ctx)[..., None]
        ctx = jnp.concatenate([ctx[..., 1:], y], axis=-1)
        preds.append(y)
    return jnp.concatenate(preds, axis=-1)


if __name__ == "__main__":
    key = jax.random.PRNGKey(0)
    N, input_size = 2, 4
    history_window = 16
    predict_window = 2
    num_channels = [8, 8, 8]      # block0: 4->8 (downsample), blocks 1-2: identity residual
    kernel_size = 2

    kx, kp, kw, kb = jax.random.split(key, 4)
    x = jax.random.normal(kx, (N, input_size, history_window), jnp.float32)  # NCL
    params = init_params(kp, input_size, num_channels, kernel_size)
    lin_w = 0.01 * jax.random.normal(kw, (input_size, num_channels[-1]), jnp.float32)
    lin_b = 0.01 * jax.random.normal(kb, (input_size,), jnp.float32)

    # One-time weight padding / im2col reshape (reused across all head calls).
    prepped = prepare_tcn(params, input_size, kernel_size)

    # Fused Pallas TCN stack vs plain-JAX reference.
    tcn_fn = jax.jit(lambda a: temporal_conv_net(a, prepped))
    tcn_out = jax.block_until_ready(tcn_fn(x))
    tcn_ref = _ref_net(x, params, kernel_size)
    assert tcn_out.shape == (N, num_channels[-1], history_window)
    assert jnp.allclose(tcn_out, tcn_ref, rtol=1e-3, atol=1e-3), \
        float(jnp.max(jnp.abs(tcn_out - tcn_ref)))

    # Full TCN.forward (autoregressive prediction head).
    fwd = jax.jit(lambda a: tcn_forward(a, prepped, lin_w, lin_b,
                                        predict_window=predict_window))
    out = jax.block_until_ready(fwd(x))
    ref = _ref_tcn_forward(x, params, lin_w, lin_b, kernel_size, predict_window)
    assert out.shape == (N, input_size, predict_window)
    assert jnp.allclose(out, ref, rtol=1e-3, atol=1e-3), \
        float(jnp.max(jnp.abs(out - ref)))

    print("KERNEL_OK")
</pallas_src>

<mosaic_0001>
module attributes {stable_mosaic.version = 11 : i64} {
  func.func @_tcn_stack_kernel(%arg0: i32, %arg1: memref<1x16x128xf32, #tpu.memory_space<vmem>>, %arg2: memref<256x128xbf16, #tpu.memory_space<vmem>>, %arg3: memref<1x128xf32, #tpu.memory_space<vmem>>, %arg4: memref<256x128xbf16, #tpu.memory_space<vmem>>, %arg5: memref<1x128xf32, #tpu.memory_space<vmem>>, %arg6: memref<128x128xbf16, #tpu.memory_space<vmem>>, %arg7: memref<1x128xf32, #tpu.memory_space<vmem>>, %arg8: memref<256x128xbf16, #tpu.memory_space<vmem>>, %arg9: memref<1x128xf32, #tpu.memory_space<vmem>>, %arg10: memref<256x128xbf16, #tpu.memory_space<vmem>>, %arg11: memref<1x128xf32, #tpu.memory_space<vmem>>, %arg12: memref<256x128xbf16, #tpu.memory_space<vmem>>, %arg13: memref<1x128xf32, #tpu.memory_space<vmem>>, %arg14: memref<256x128xbf16, #tpu.memory_space<vmem>>, %arg15: memref<1x128xf32, #tpu.memory_space<vmem>>, %arg16: memref<1x16x128xf32, #tpu.memory_space<vmem>>, %arg17: memref<24x128xf32, #tpu.memory_space<vmem>>) attributes {dimension_semantics = [#tpu.dimension_semantics<parallel>], iteration_bounds = array<i64: 2>, scalar_prefetch = 0 : i64, scratch_operands = 1 : i64, tpu.core_type = #tpu.core_type<tc>, window_params = [{transform_indices = @transform_0, window_bounds = array<i64: 1, 16, 128>}, {pipeline_mode = #tpu.pipeline_mode<synchronous>, transform_indices = @transform_1, window_bounds = array<i64: 256, 128>}, {pipeline_mode = #tpu.pipeline_mode<synchronous>, transform_indices = @transform_2, window_bounds = array<i64: 1, 128>}, {pipeline_mode = #tpu.pipeline_mode<synchronous>, transform_indices = @transform_3, window_bounds = array<i64: 256, 128>}, {pipeline_mode = #tpu.pipeline_mode<synchronous>, transform_indices = @transform_4, window_bounds = array<i64: 1, 128>}, {pipeline_mode = #tpu.pipeline_mode<synchronous>, transform_indices = @transform_5, window_bounds = array<i64: 128, 128>}, {pipeline_mode = #tpu.pipeline_mode<synchronous>, transform_indices = @transform_6, window_bounds = array<i64: 1, 128>}, {pipeline_mode = #tpu.pipeline_mode<synchronous>, transform_indices = @transform_7, window_bounds = array<i64: 256, 128>}, {pipeline_mode = #tpu.pipeline_mode<synchronous>, transform_indices = @transform_8, window_bounds = array<i64: 1, 128>}, {pipeline_mode = #tpu.pipeline_mode<synchronous>, transform_indices = @transform_9, window_bounds = array<i64: 256, 128>}, {pipeline_mode = #tpu.pipeline_mode<synchronous>, transform_indices = @transform_10, window_bounds = array<i64: 1, 128>}, {pipeline_mode = #tpu.pipeline_mode<synchronous>, transform_indices = @transform_11, window_bounds = array<i64: 256, 128>}, {pipeline_mode = #tpu.pipeline_mode<synchronous>, transform_indices = @transform_12, window_bounds = array<i64: 1, 128>}, {pipeline_mode = #tpu.pipeline_mode<synchronous>, transform_indices = @transform_13, window_bounds = array<i64: 256, 128>}, {pipeline_mode = #tpu.pipeline_mode<synchronous>, transform_indices = @transform_14, window_bounds = array<i64: 1, 128>}, {transform_indices = @transform_15, window_bounds = array<i64: 1, 16, 128>}]} {
    %cst = arith.constant 0.000000e+00 : f32
    %0 = vector.broadcast %cst : f32 to vector<8x128xf32>
    %c0 = arith.constant 0 : index
    %c0_0 = arith.constant 0 : index
    %1 = vector.load %arg17[%c0, %c0_0] : memref<24x128xf32, #tpu.memory_space<vmem>>, vector<8x128xf32>
    tpu.vector_store %arg17[%c0, %c0_0], %0 {strides = array<i32>} : memref<24x128xf32, #tpu.memory_space<vmem>>, vector<8x128xf32>,
    %c0_1 = arith.constant 0 : index
    %c0_2 = arith.constant 0 : index
    %c0_3 = arith.constant 0 : index
    %2 = vector.load %arg1[%c0_1, %c0_2, %c0_3] : memref<1x16x128xf32, #tpu.memory_space<vmem>>, vector<1x16x128xf32>
    %3 = vector.shape_cast %2 : vector<1x16x128xf32> to vector<16x128xf32>
    %c8 = arith.constant 8 : index
    %c0_4 = arith.constant 0 : index
    %4 = vector.load %arg17[%c8, %c0_4] : memref<24x128xf32, #tpu.memory_space<vmem>>, vector<16x128xf32>
    tpu.vector_store %arg17[%c8, %c0_4], %3 {strides = array<i32>} : memref<24x128xf32, #tpu.memory_space<vmem>>, vector<16x128xf32>,
    %c7 = arith.constant 7 : index
    %c0_5 = arith.constant 0 : index
    %5 = vector.load %arg17[%c7, %c0_5] : memref<24x128xf32, #tpu.memory_space<vmem>>, vector<16x128xf32>
    %6 = tpu.concatenate %5, %3 in 1 : vector<16x128xf32>, vector<16x128xf32> -> vector<16x256xf32>
    %7 = arith.truncf %6 : vector<16x256xf32> to vector<16x256xbf16>
    %c0_6 = arith.constant 0 : index
    %c0_7 = arith.constant 0 : index
    %8 = vector.load %arg2[%c0_6, %c0_7] : memref<256x128xbf16, #tpu.memory_space<vmem>>, vector<256x128xbf16>
    %cst_8 = arith.constant dense<0.000000e+00> : vector<16x128xf32>
    %9 = tpu.matmul %7, %8, %cst_8 {dimension_numbers = #tpu.dot_dimension_numbers<[1], [0], [0], [1], [0, 0, 1, 1], [], []>} : vector<16x256xbf16>, vector<256x128xbf16>, vector<16x128xf32> -> vector<16x128xf32>
    %c0_9 = arith.constant 0 : index
    %c0_10 = arith.constant 0 : index
    %10 = vector.load %arg3[%c0_9, %c0_10] : memref<1x128xf32, #tpu.memory_space<vmem>>, vector<1x128xf32>
    %11 = vector.broadcast %10 : vector<1x128xf32> to vector<16x128xf32>
    %12 = arith.addf %9, %11 : vector<16x128xf32>
    %cst_11 = arith.constant 0.000000e+00 : f32
    %13 = vector.broadcast %cst_11 : f32 to vector<16x128xf32>
    %14 = arith.maximumf %12, %13 : vector<16x128xf32>
    %c8_12 = arith.constant 8 : index
    %c0_13 = arith.constant 0 : index
    %15 = vector.load %arg17[%c8_12, %c0_13] : memref<24x128xf32, #tpu.memory_space<vmem>>, vector<16x128xf32>
    tpu.vector_store %arg17[%c8_12, %c0_13], %14 {strides = array<i32>} : memref<24x128xf32, #tpu.memory_space<vmem>>, vector<16x128xf32>,
    %c7_14 = arith.constant 7 : index
    %c0_15 = arith.constant 0 : index
    %16 = vector.load %arg17[%c7_14, %c0_15] : memref<24x128xf32, #tpu.memory_space<vmem>>, vector<16x128xf32>
    %17 = tpu.concatenate %16, %14 in 1 : vector<16x128xf32>, vector<16x128xf32> -> vector<16x256xf32>
    %18 = arith.truncf %17 : vector<16x256xf32> to vector<16x256xbf16>
    %c0_16 = arith.constant 0 : index
    %c0_17 = arith.constant 0 : index
    %19 = vector.load %arg4[%c0_16, %c0_17] : memref<256x128xbf16, #tpu.memory_space<vmem>>, vector<256x128xbf16>
    %cst_18 = arith.constant dense<0.000000e+00> : vector<16x128xf32>
    %20 = tpu.matmul %18, %19, %cst_18 {dimension_numbers = #tpu.dot_dimension_numbers<[1], [0], [0], [1], [0, 0, 1, 1], [], []>} : vector<16x256xbf16>, vector<256x128xbf16>, vector<16x128xf32> -> vector<16x128xf32>
    %c0_19 = arith.constant 0 : index
    %c0_20 = arith.constant 0 : index
    %21 = vector.load %arg5[%c0_19, %c0_20] : memref<1x128xf32, #tpu.memory_space<vmem>>, vector<1x128xf32>
    %22 = vector.broadcast %21 : vector<1x128xf32> to vector<16x128xf32>
    %23 = arith.addf %20, %22 : vector<16x128xf32>
    %cst_21 = arith.constant 0.000000e+00 : f32
    %24 = vector.broadcast %cst_21 : f32 to vector<16x128xf32>
    %25 = arith.maximumf %23, %24 : vector<16x128xf32>
    %26 = arith.truncf %3 : vector<16x128xf32> to vector<16x128xbf16>
    %c0_22 = arith.constant 0 : index
    %c0_23 = arith.constant 0 : index
    %27 = vector.load %arg6[%c0_22, %c0_23] : memref<128x128xbf16, #tpu.memory_space<vmem>>, vector<128x128xbf16>
    %cst_24 = arith.constant dense<0.000000e+00> : vector<16x128xf32>
    %28 = tpu.matmul %26, %27, %cst_24 {dimension_numbers = #tpu.dot_dimension_numbers<[1], [0], [0], [1], [0, 0, 1, 1], [], []>} : vector<16x128xbf16>, vector<128x128xbf16>, vector<16x128xf32> -> vector<16x128xf32>
    %c0_25 = arith.constant 0 : index
    %c0_26 = arith.constant 0 : index
    %29 = vector.load %arg7[%c0_25, %c0_26] : memref<1x128xf32, #tpu.memory_space<vmem>>, vector<1x128xf32>
    %30 = vector.broadcast %29 : vector<1x128xf32> to vector<16x128xf32>
    %31 = arith.addf %28, %30 : vector<16x128xf32>
    %32 = arith.addf %25, %31 : vector<16x128xf32>
    %cst_27 = arith.constant 0.000000e+00 : f32
    %33 = vector.broadcast %cst_27 : f32 to vector<16x128xf32>
    %34 = arith.maximumf %32, %33 : vector<16x128xf32>
    %c8_28 = arith.constant 8 : index
    %c0_29 = arith.constant 0 : index
    %35 = vector.load %arg17[%c8_28, %c0_29] : memref<24x128xf32, #tpu.memory_space<vmem>>, vector<16x128xf32>
    tpu.vector_store %arg17[%c8_28, %c0_29], %34 {strides = array<i32>} : memref<24x128xf32, #tpu.memory_space<vmem>>, vector<16x128xf32>,
    %c6 = arith.constant 6 : index
    %c0_30 = arith.constant 0 : index
    %36 = vector.load %arg17[%c6, %c0_30] : memref<24x128xf32, #tpu.memory_space<vmem>>, vector<16x128xf32>
    %37 = tpu.concatenate %36, %34 in 1 : vector<16x128xf32>, vector<16x128xf32> -> vector<16x256xf32>
    %38 = arith.truncf %37 : vector<16x256xf32> to vector<16x256xbf16>
    %c0_31 = arith.constant 0 : index
    %c0_32 = arith.constant 0 : index
    %39 = vector.load %arg8[%c0_31, %c0_32] : memref<256x128xbf16, #tpu.memory_space<vmem>>, vector<256x128xbf16>
    %cst_33 = arith.constant dense<0.000000e+00> : vector<16x128xf32>
    %40 = tpu.matmul %38, %39, %cst_33 {dimension_numbers = #tpu.dot_dimension_numbers<[1], [0], [0], [1], [0, 0, 1, 1], [], []>} : vector<16x256xbf16>, vector<256x128xbf16>, vector<16x128xf32> -> vector<16x128xf32>
    %c0_34 = arith.constant 0 : index
    %c0_35 = arith.constant 0 : index
    %41 = vector.load %arg9[%c0_34, %c0_35] : memref<1x128xf32, #tpu.memory_space<vmem>>, vector<1x128xf32>
    %42 = vector.broadcast %41 : vector<1x128xf32> to vector<16x128xf32>
    %43 = arith.addf %40, %42 : vector<16x128xf32>
    %cst_36 = arith.constant 0.000000e+00 : f32
    %44 = vector.broadcast %cst_36 : f32 to vector<16x128xf32>
    %45 = arith.maximumf %43, %44 : vector<16x128xf32>
    %c8_37 = arith.constant 8 : index
    %c0_38 = arith.constant 0 : index
    %46 = vector.load %arg17[%c8_37, %c0_38] : memref<24x128xf32, #tpu.memory_space<vmem>>, vector<16x128xf32>
    tpu.vector_store %arg17[%c8_37, %c0_38], %45 {strides = array<i32>} : memref<24x128xf32, #tpu.memory_space<vmem>>, vector<16x128xf32>,
    %c6_39 = arith.constant 6 : index
    %c0_40 = arith.constant 0 : index
    %47 = vector.load %arg17[%c6_39, %c0_40] : memref<24x128xf32, #tpu.memory_space<vmem>>, vector<16x128xf32>
    %48 = tpu.concatenate %47, %45 in 1 : vector<16x128xf32>, vector<16x128xf32> -> vector<16x256xf32>
    %49 = arith.truncf %48 : vector<16x256xf32> to vector<16x256xbf16>
    %c0_41 = arith.constant 0 : index
    %c0_42 = arith.constant 0 : index
    %50 = vector.load %arg10[%c0_41, %c0_42] : memref<256x128xbf16, #tpu.memory_space<vmem>>, vector<256x128xbf16>
    %cst_43 = arith.constant dense<0.000000e+00> : vector<16x128xf32>
    %51 = tpu.matmul %49, %50, %cst_43 {dimension_numbers = #tpu.dot_dimension_numbers<[1], [0], [0], [1], [0, 0, 1, 1], [], []>} : vector<16x256xbf16>, vector<256x128xbf16>, vector<16x128xf32> -> vector<16x128xf32>
    %c0_44 = arith.constant 0 : index
    %c0_45 = arith.constant 0 : index
    %52 = vector.load %arg11[%c0_44, %c0_45] : memref<1x128xf32, #tpu.memory_space<vmem>>, vector<1x128xf32>
    %53 = vector.broadcast %52 : vector<1x128xf32> to vector<16x128xf32>
    %54 = arith.addf %51, %53 : vector<16x128xf32>
    %cst_46 = arith.constant 0.000000e+00 : f32
    %55 = vector.broadcast %cst_46 : f32 to vector<16x128xf32>
    %56 = arith.maximumf %54, %55 : vector<16x128xf32>
    %57 = arith.addf %56, %34 : vector<16x128xf32>
    %cst_47 = arith.constant 0.000000e+00 : f32
    %58 = vector.broadcast %cst_47 : f32 to vector<16x128xf32>
    %59 = arith.maximumf %57, %58 : vector<16x128xf32>
    %c8_48 = arith.constant 8 : index
    %c0_49 = arith.constant 0 : index
    %60 = vector.load %arg17[%c8_48, %c0_49] : memref<24x128xf32, #tpu.memory_space<vmem>>, vector<16x128xf32>
    tpu.vector_store %arg17[%c8_48, %c0_49], %59 {strides = array<i32>} : memref<24x128xf32, #tpu.memory_space<vmem>>, vector<16x128xf32>,
    %c4 = arith.constant 4 : index
    %c0_50 = arith.constant 0 : index
    %61 = vector.load %arg17[%c4, %c0_50] : memref<24x128xf32, #tpu.memory_space<vmem>>, vector<16x128xf32>
    %62 = tpu.concatenate %61, %59 in 1 : vector<16x128xf32>, vector<16x128xf32> -> vector<16x256xf32>
    %63 = arith.truncf %62 : vector<16x256xf32> to vector<16x256xbf16>
    %c0_51 = arith.constant 0 : index
    %c0_52 = arith.constant 0 : index
    %64 = vector.load %arg12[%c0_51, %c0_52] : memref<256x128xbf16, #tpu.memory_space<vmem>>, vector<256x128xbf16>
    %cst_53 = arith.constant dense<0.000000e+00> : vector<16x128xf32>
    %65 = tpu.matmul %63, %64, %cst_53 {dimension_numbers = #tpu.dot_dimension_numbers<[1], [0], [0], [1], [0, 0, 1, 1], [], []>} : vector<16x256xbf16>, vector<256x128xbf16>, vector<16x128xf32> -> vector<16x128xf32>
    %c0_54 = arith.constant 0 : index
    %c0_55 = arith.constant 0 : index
    %66 = vector.load %arg13[%c0_54, %c0_55] : memref<1x128xf32, #tpu.memory_space<vmem>>, vector<1x128xf32>
    %67 = vector.broadcast %66 : vector<1x128xf32> to vector<16x128xf32>
    %68 = arith.addf %65, %67 : vector<16x128xf32>
    %cst_56 = arith.constant 0.000000e+00 : f32
    %69 = vector.broadcast %cst_56 : f32 to vector<16x128xf32>
    %70 = arith.maximumf %68, %69 : vector<16x128xf32>
    %c8_57 = arith.constant 8 : index
    %c0_58 = arith.constant 0 : index
    %71 = vector.load %arg17[%c8_57, %c0_58] : memref<24x128xf32, #tpu.memory_space<vmem>>, vector<16x128xf32>
    tpu.vector_store %arg17[%c8_57, %c0_58], %70 {strides = array<i32>} : memref<24x128xf32, #tpu.memory_space<vmem>>, vector<16x128xf32>,
    %c4_59 = arith.constant 4 : index
    %c0_60 = arith.constant 0 : index
    %72 = vector.load %arg17[%c4_59, %c0_60] : memref<24x128xf32, #tpu.memory_space<vmem>>, vector<16x128xf32>
    %73 = tpu.concatenate %72, %70 in 1 : vector<16x128xf32>, vector<16x128xf32> -> vector<16x256xf32>
    %74 = arith.truncf %73 : vector<16x256xf32> to vector<16x256xbf16>
    %c0_61 = arith.constant 0 : index
    %c0_62 = arith.constant 0 : index
    %75 = vector.load %arg14[%c0_61, %c0_62] : memref<256x128xbf16, #tpu.memory_space<vmem>>, vector<256x128xbf16>
    %cst_63 = arith.constant dense<0.000000e+00> : vector<16x128xf32>
    %76 = tpu.matmul %74, %75, %cst_63 {dimension_numbers = #tpu.dot_dimension_numbers<[1], [0], [0], [1], [0, 0, 1, 1], [], []>} : vector<16x256xbf16>, vector<256x128xbf16>, vector<16x128xf32> -> vector<16x128xf32>
    %c0_64 = arith.constant 0 : index
    %c0_65 = arith.constant 0 : index
    %77 = vector.load %arg15[%c0_64, %c0_65] : memref<1x128xf32, #tpu.memory_space<vmem>>, vector<1x128xf32>
    %78 = vector.broadcast %77 : vector<1x128xf32> to vector<16x128xf32>
    %79 = arith.addf %76, %78 : vector<16x128xf32>
    %cst_66 = arith.constant 0.000000e+00 : f32
    %80 = vector.broadcast %cst_66 : f32 to vector<16x128xf32>
    %81 = arith.maximumf %79, %80 : vector<16x128xf32>
    %82 = arith.addf %81, %59 : vector<16x128xf32>
    %cst_67 = arith.constant 0.000000e+00 : f32
    %83 = vector.broadcast %cst_67 : f32 to vector<16x128xf32>
    %84 = arith.maximumf %82, %83 : vector<16x128xf32>
    %c0_68 = arith.constant 0 : index
    %c0_69 = arith.constant 0 : index
    %c0_70 = arith.constant 0 : index
    %85 = vector.load %arg16[%c0_68, %c0_69, %c0_70] : memref<1x16x128xf32, #tpu.memory_space<vmem>>, vector<1x16x128xf32>
    %86 = vector.shape_cast %85 : vector<1x16x128xf32> to vector<16x128xf32>
    %87 = vector.shape_cast %84 : vector<16x128xf32> to vector<1x16x128xf32>
    tpu.vector_store %arg16[%c0_68, %c0_69, %c0_70], %87 {strides = array<i32>} : memref<1x16x128xf32, #tpu.memory_space<vmem>>, vector<1x16x128xf32>,
    return
  }
  func.func @transform_0(%arg0: i32) -> (i32, i32, i32) {
    %c0_i32 = arith.constant 0 : i32
    %c0_i32_0 = arith.constant 0 : i32
    %c0_i32_1 = arith.constant 0 : i32
    return %arg0, %c0_i32, %c0_i32_0 : i32, i32, i32
  }
  func.func @transform_1(%arg0: i32) -> (i32, i32) {
    %c0_i32 = arith.constant 0 : i32
    %c0_i32_0 = arith.constant 0 : i32
    %c0_i32_1 = arith.constant 0 : i32
    return %c0_i32, %c0_i32_0 : i32, i32
  }
  func.func @transform_2(%arg0: i32) -> (i32, i32) {
    %c0_i32 = arith.constant 0 : i32
    %c0_i32_0 = arith.constant 0 : i32
    %c0_i32_1 = arith.constant 0 : i32
    return %c0_i32, %c0_i32_0 : i32, i32
  }
  func.func @transform_3(%arg0: i32) -> (i32, i32) {
    %c0_i32 = arith.constant 0 : i32
    %c0_i32_0 = arith.constant 0 : i32
    %c0_i32_1 = arith.constant 0 : i32
    return %c0_i32, %c0_i32_0 : i32, i32
  }
  func.func @transform_4(%arg0: i32) -> (i32, i32) {
    %c0_i32 = arith.constant 0 : i32
    %c0_i32_0 = arith.constant 0 : i32
    %c0_i32_1 = arith.constant 0 : i32
    return %c0_i32, %c0_i32_0 : i32, i32
  }
  func.func @transform_5(%arg0: i32) -> (i32, i32) {
    %c0_i32 = arith.constant 0 : i32
    %c0_i32_0 = arith.constant 0 : i32
    %c0_i32_1 = arith.constant 0 : i32
    return %c0_i32, %c0_i32_0 : i32, i32
  }
  func.func @transform_6(%arg0: i32) -> (i32, i32) {
    %c0_i32 = arith.constant 0 : i32
    %c0_i32_0 = arith.constant 0 : i32
    %c0_i32_1 = arith.constant 0 : i32
    return %c0_i32, %c0_i32_0 : i32, i32
  }
  func.func @transform_7(%arg0: i32) -> (i32, i32) {
    %c0_i32 = arith.constant 0 : i32
    %c0_i32_0 = arith.constant 0 : i32
    %c0_i32_1 = arith.constant 0 : i32
    return %c0_i32, %c0_i32_0 : i32, i32
  }
  func.func @transform_8(%arg0: i32) -> (i32, i32) {
    %c0_i32 = arith.constant 0 : i32
    %c0_i32_0 = arith.constant 0 : i32
    %c0_i32_1 = arith.constant 0 : i32
    return %c0_i32, %c0_i32_0 : i32, i32
  }
  func.func @transform_9(%arg0: i32) -> (i32, i32) {
    %c0_i32 = arith.constant 0 : i32
    %c0_i32_0 = arith.constant 0 : i32
    %c0_i32_1 = arith.constant 0 : i32
    return %c0_i32, %c0_i32_0 : i32, i32
  }
  func.func @transform_10(%arg0: i32) -> (i32, i32) {
    %c0_i32 = arith.constant 0 : i32
    %c0_i32_0 = arith.constant 0 : i32
    %c0_i32_1 = arith.constant 0 : i32
    return %c0_i32, %c0_i32_0 : i32, i32
  }
  func.func @transform_11(%arg0: i32) -> (i32, i32) {
    %c0_i32 = arith.constant 0 : i32
    %c0_i32_0 = arith.constant 0 : i32
    %c0_i32_1 = arith.constant 0 : i32
    return %c0_i32, %c0_i32_0 : i32, i32
  }
  func.func @transform_12(%arg0: i32) -> (i32, i32) {
    %c0_i32 = arith.constant 0 : i32
    %c0_i32_0 = arith.constant 0 : i32
    %c0_i32_1 = arith.constant 0 : i32
    return %c0_i32, %c0_i32_0 : i32, i32
  }
  func.func @transform_13(%arg0: i32) -> (i32, i32) {
    %c0_i32 = arith.constant 0 : i32
    %c0_i32_0 = arith.constant 0 : i32
    %c0_i32_1 = arith.constant 0 : i32
    return %c0_i32, %c0_i32_0 : i32, i32
  }
  func.func @transform_14(%arg0: i32) -> (i32, i32) {
    %c0_i32 = arith.constant 0 : i32
    %c0_i32_0 = arith.constant 0 : i32
    %c0_i32_1 = arith.constant 0 : i32
    return %c0_i32, %c0_i32_0 : i32, i32
  }
  func.func @transform_15(%arg0: i32) -> (i32, i32, i32) {
    %c0_i32 = arith.constant 0 : i32
    %c0_i32_0 = arith.constant 0 : i32
    %c0_i32_1 = arith.constant 0 : i32
    return %arg0, %c0_i32, %c0_i32_0 : i32, i32, i32
  }
}

</mosaic_0001>

<llo_original>
// kernel: _lambda_.1
$region0: #{_lambda_.1}
  #allocation0 [shape = 'u32[]', space=smem, size = 0x4, offset = 0x4, fixed_abs, tag = 'smem constant byte address 0x4 - core index']
  #allocation1 [shape = 'u32[144,128]{1,0:T(1,128)}', space=vmem, size = 0x12000, scoped, tag = 'internal scratch']
  #allocation2 [shape = 'f32[24,128]{1,0:T(8,128)}', space=vmem, size = 0x3000, scoped, tag = 'scratch operand']
  %s0 = inlined_call_operand.vmem [shape: f32[2,16,128], index: 0, kind: input, shape index: {}]
  %s1 = inlined_call_operand.hbm [shape: bf16[256,128], index: 1, kind: input, shape index: {}]
  %s2 = inlined_call_operand.hbm [shape: f32[1,128], index: 2, kind: input, shape index: {}]
  %s3 = inlined_call_operand.hbm [shape: bf16[256,128], index: 3, kind: input, shape index: {}]
  %s4 = inlined_call_operand.hbm [shape: f32[1,128], index: 4, kind: input, shape index: {}]
  %s5 = inlined_call_operand.hbm [shape: bf16[128,128], index: 5, kind: input, shape index: {}]
  %s6 = inlined_call_operand.hbm [shape: f32[1,128], index: 6, kind: input, shape index: {}]
  %s7 = inlined_call_operand.hbm [shape: bf16[256,128], index: 7, kind: input, shape index: {}]
  %s8 = inlined_call_operand.hbm [shape: f32[1,128], index: 8, kind: input, shape index: {}]
  %s9 = inlined_call_operand.hbm [shape: bf16[256,128], index: 9, kind: input, shape index: {}]
  %s10 = inlined_call_operand.hbm [shape: f32[1,128], index: 10, kind: input, shape index: {}]
  %s11 = inlined_call_operand.hbm [shape: bf16[256,128], index: 11, kind: input, shape index: {}]
  %s12 = inlined_call_operand.vmem [shape: f32[1,128], index: 12, kind: input, shape index: {}]
  %s13 = inlined_call_operand.vmem [shape: bf16[256,128], index: 13, kind: input, shape index: {}]
  %s14 = inlined_call_operand.vmem [shape: f32[1,128], index: 14, kind: input, shape index: {}]
  %s15 = inlined_call_operand.vmem [shape: f32[2,16,128], index: 15, kind: output, shape index: {}]
  %s16 = sld [smem:[#allocation0]]
  $region137: #{_lambda_.1} parent=0
    _
  %s18 = ssub.s32 1, %s16
  %s19 = scalar_select 0, %s18, %s16
  $region1: #{_lambda_.1} parent=0
    #allocation3 [shape = 'u8[65536]{0}', space=vmem, size = 0x10000, scoped, tag = 'input window, operand 1, single buffered']
    #allocation4 [shape = 's32[2]{0}', space=sflag, size = 0x8, scoped, tag = 'scoped memory for _lambda_.1']
    #allocation5 [shape = 'u8[512]{0}', space=vmem, size = 0x400, scoped, tag = 'input window, operand 2, single buffered']
    #allocation6 [shape = 's32[1]{0}', space=sflag, size = 0x4, scoped, tag = 'scoped memory for _lambda_.1']
    #allocation7 [shape = 'u8[65536]{0}', space=vmem, size = 0x10000, scoped, tag = 'input window, operand 3, single buffered']
    #allocation8 [shape = 'u8[512]{0}', space=vmem, size = 0x400, scoped, tag = 'input window, operand 4, single buffered']
    #allocation9 [shape = 's32[1]{0}', space=sflag, size = 0x4, scoped, tag = 'scoped memory for _lambda_.1']
    #allocation10 [shape = 'u8[32768]{0}', space=vmem, size = 0x8000, scoped, tag = 'input window, operand 5, single buffered']
    #allocation11 [shape = 'u8[512]{0}', space=vmem, size = 0x400, scoped, tag = 'input window, operand 6, single buffered']
    #allocation12 [shape = 's32[1]{0}', space=sflag, size = 0x4, scoped, tag = 'scoped memory for _lambda_.1']
    #allocation13 [shape = 'u8[65536]{0}', space=vmem, size = 0x10000, scoped, tag = 'input window, operand 7, single buffered']
    #allocation14 [shape = 'u8[512]{0}', space=vmem, size = 0x400, scoped, tag = 'input window, operand 8, single buffered']
    #allocation15 [shape = 's32[1]{0}', space=sflag, size = 0x4, scoped, tag = 'scoped memory for _lambda_.1']
    #allocation16 [shape = 'u8[65536]{0}', space=vmem, size = 0x10000, scoped, tag = 'input window, operand 9, single buffered']
    #allocation17 [shape = 'u8[512]{0}', space=vmem, size = 0x400, scoped, tag = 'input window, operand 10, single buffered']
    #allocation18 [shape = 's32[1]{0}', space=sflag, size = 0x4, scoped, tag = 'scoped memory for _lambda_.1']
    #allocation19 [shape = 'u8[65536]{0}', space=vmem, size = 0x10000, scoped, tag = 'input window, operand 11, single buffered']
    %20 = vsyncpa [#allocation4], 0
    %21 = vsyncpa [#allocation6], 0
    %22 = vsyncpa [#allocation9], 0
    %23 = vsyncpa [#allocation12], 0
    %24 = vsyncpa [#allocation15], 0
    %25 = vsyncpa [#allocation18], 0
    loop: start=0, step=1, limit=4
    $region2: #{_lambda_.1} parent=1 // loop_pre_header
      _
    $region3: #{_lambda_.1} parent=1 // loop_header
      %s27 = sphi 0, %s31
      %p28 = scmp.ge.s32.totalorder %s27, 4
      %s37 = sphi 0, %s39
      %s40 = sphi 0, %s37
      %s41 = sphi 0, %s40
      %s57 = sphi 0, %s41
      %s61 = sphi 0, %s61
      %s63 = sphi 0, %s61
      %s64 = sphi 0, %s63
      %s78 = sphi 0, %s64
      %s82 = sphi 0, %s82
      %s84 = sphi 0, %s82
      %s85 = sphi 0, %s84
      %s99 = sphi 0, %s85
      %s103 = sphi 0, %s103
      %s105 = sphi 0, %s103
      %s106 = sphi 0, %s105
      %s120 = sphi 0, %s106
      %s124 = sphi 0, %s124
      %s126 = sphi 0, %s124
      %s127 = sphi 0, %s126
      %s141 = sphi 0, %s127
      %s145 = sphi 0, %s145
      %s147 = sphi 0, %s145
      %s148 = sphi 0, %s147
      %s162 = sphi 0, %s148
      %s166 = sphi 0, %s166
      %s168 = sphi 0, %s166
      %s169 = sphi 0, %s168
      %s183 = sphi 0, %s169
      %s187 = sphi 0, %s187
      %s189 = sphi 0, %s187
      %s190 = sphi 0, %s189
      %s204 = sphi 0, %s190
      %s208 = sphi 0, %s208
      %s210 = sphi 0, %s208
      %s211 = sphi 0, %s210
      %s225 = sphi 0, %s211
      %s229 = sphi 0, %s229
      %s231 = sphi 0, %s229
      %s232 = sphi 0, %s231
      %s246 = sphi 0, %s232
      %s250 = sphi 0, %s250
      %s252 = sphi 0, %s250
      %s253 = sphi 0, %s252
      %s267 = sphi 0, %s253
      %s271 = sphi 0, %s271
      %s273 = sphi 0, %s271
      %s274 = sphi 0, %s273
      %s288 = sphi 0, %s274
      %s292 = sphi 0, %s292
      %s294 = sphi 0, %s292
      %s295 = sphi 0, %s294
      %s309 = sphi 0, %s295
      %s313 = sphi 0, %s313
      %s315 = sphi 0, %s313
      %s316 = sphi 0, %s315
      %s330 = sphi 0, %s316
      %s334 = sphi 0, %s334
      %s336 = sphi 0, %s334
      %s337 = sphi 0, %s336
      %s351 = sphi 0, %s337
      %s357 = sphi 0, %s359
      %s360 = sphi 0, %s357
      %s361 = sphi 0, %s360
      %s377 = sphi 0, %s361
    $region4: #{_lambda_.1} parent=1 // loop_header_branch
      %30 = sbr.rel (%p28) target = $region8
    $region5: #{_lambda_.1} parent=1 // loop_body
      %s32 = ssub.s32 %s27, 1
      %s33 = ssub.s32 %s27, 2
      %s34 = sadd.s32 %s27, 1
      %s35 = ssub.s32 %s27, %s34
      %p36 = scmp.eq.s32.totalorder %s35, 0
      %s38 = sadd.s32 %s37, 1
      %s39 = scalar_select %p36, %s37, %s38
      %p42 = pneg %p36
      %p43 = scmp.eq.s32.totalorder %s27, 1
      %p44 = por %p42, %p43
      %p45 = scmp.ne.s32.totalorder %s37, %s40
      %p46 = scmp.eq.s32.totalorder %s27, 0
      %p47 = por %p45, %p46
      %p48 = scmp.ne.s32.totalorder %s37, %s40
      %p49 = scmp.eq.s32.totalorder %s32, 1
      %p50 = por %p48, %p49
      %p51 = scmp.ne.s32.totalorder %s40, %s41
      %p52 = scmp.eq.s32.totalorder %s32, 0
      %p53 = por %p51, %p52
      %p54 = scmp.ne.s32.totalorder %s40, %s41
      %p55 = scmp.eq.s32.totalorder %s33, 1
      %p56 = por %p54, %p55
      %p58 = scmp.ne.s32.totalorder %s41, %s57
      %p59 = scmp.eq.s32.totalorder %s33, 0
      %p60 = por %p58, %p59
      %s62 = sadd.s32 %s61, 1
      %p65 = scmp.eq.s32.totalorder %s27, 1
      %p66 = scmp.ne.s32.totalorder %s61, %s63
      %p67 = scmp.eq.s32.totalorder %s27, 0
      %p68 = por %p66, %p67
      %p69 = scmp.ne.s32.totalorder %s61, %s63
      %p70 = scmp.eq.s32.totalorder %s32, 1
      %p71 = por %p69, %p70
      %p72 = scmp.ne.s32.totalorder %s63, %s64
      %p73 = scmp.eq.s32.totalorder %s32, 0
      %p74 = por %p72, %p73
      %p75 = scmp.ne.s32.totalorder %s63, %s64
      %p76 = scmp.eq.s32.totalorder %s33, 1
      %p77 = por %p75, %p76
      %p79 = scmp.ne.s32.totalorder %s64, %s78
      %p80 = scmp.eq.s32.totalorder %s33, 0
      %p81 = por %p79, %p80
      %s83 = sadd.s32 %s82, 1
      %p86 = scmp.eq.s32.totalorder %s27, 1
      %p87 = scmp.ne.s32.totalorder %s82, %s84
      %p88 = scmp.eq.s32.totalorder %s27, 0
      %p89 = por %p87, %p88
      %p90 = scmp.ne.s32.totalorder %s82, %s84
      %p91 = scmp.eq.s32.totalorder %s32, 1
      %p92 = por %p90, %p91
      %p93 = scmp.ne.s32.totalorder %s84, %s85
      %p94 = scmp.eq.s32.totalorder %s32, 0
      %p95 = por %p93, %p94
      %p96 = scmp.ne.s32.totalorder %s84, %s85
      %p97 = scmp.eq.s32.totalorder %s33, 1
      %p98 = por %p96, %p97
      %p100 = scmp.ne.s32.totalorder %s85, %s99
      %p101 = scmp.eq.s32.totalorder %s33, 0
      %p102 = por %p100, %p101
      %s104 = sadd.s32 %s103, 1
      %p107 = scmp.eq.s32.totalorder %s27, 1
      %p108 = scmp.ne.s32.totalorder %s103, %s105
      %p109 = scmp.eq.s32.totalorder %s27, 0
      %p110 = por %p108, %p109
      %p111 = scmp.ne.s32.totalorder %s103, %s105
      %p112 = scmp.eq.s32.totalorder %s32, 1
      %p113 = por %p111, %p112
      %p114 = scmp.ne.s32.totalorder %s105, %s106
      %p115 = scmp.eq.s32.totalorder %s32, 0
      %p116 = por %p114, %p115
      %p117 = scmp.ne.s32.totalorder %s105, %s106
      %p118 = scmp.eq.s32.totalorder %s33, 1
      %p119 = por %p117, %p118
      %p121 = scmp.ne.s32.totalorder %s106, %s120
      %p122 = scmp.eq.s32.totalorder %s33, 0
      %p123 = por %p121, %p122
      %s125 = sadd.s32 %s124, 1
      %p128 = scmp.eq.s32.totalorder %s27, 1
      %p129 = scmp.ne.s32.totalorder %s124, %s126
      %p130 = scmp.eq.s32.totalorder %s27, 0
      %p131 = por %p129, %p130
      %p132 = scmp.ne.s32.totalorder %s124, %s126
      %p133 = scmp.eq.s32.totalorder %s32, 1
      %p134 = por %p132, %p133
      %p135 = scmp.ne.s32.totalorder %s126, %s127
      %p136 = scmp.eq.s32.totalorder %s32, 0
      %p137 = por %p135, %p136
      %p138 = scmp.ne.s32.totalorder %s126, %s127
      %p139 = scmp.eq.s32.totalorder %s33, 1
      %p140 = por %p138, %p139
      %p142 = scmp.ne.s32.totalorder %s127, %s141
      %p143 = scmp.eq.s32.totalorder %s33, 0
      %p144 = por %p142, %p143
      %s146 = sadd.s32 %s145, 1
      %p149 = scmp.eq.s32.totalorder %s27, 1
      %p150 = scmp.ne.s32.totalorder %s145, %s147
      %p151 = scmp.eq.s32.totalorder %s27, 0
      %p152 = por %p150, %p151
      %p153 = scmp.ne.s32.totalorder %s145, %s147
      %p154 = scmp.eq.s32.totalorder %s32, 1
      %p155 = por %p153, %p154
      %p156 = scmp.ne.s32.totalorder %s147, %s148
      %p157 = scmp.eq.s32.totalorder %s32, 0
      %p158 = por %p156, %p157
      %p159 = scmp.ne.s32.totalorder %s147, %s148
      %p160 = scmp.eq.s32.totalorder %s33, 1
      %p161 = por %p159, %p160
      %p163 = scmp.ne.s32.totalorder %s148, %s162
      %p164 = scmp.eq.s32.totalorder %s33, 0
      %p165 = por %p163, %p164
      %s167 = sadd.s32 %s166, 1
      %p170 = scmp.eq.s32.totalorder %s27, 1
      %p171 = scmp.ne.s32.totalorder %s166, %s168
      %p172 = scmp.eq.s32.totalorder %s27, 0
      %p173 = por %p171, %p172
      %p174 = scmp.ne.s32.totalorder %s166, %s168
      %p175 = scmp.eq.s32.totalorder %s32, 1
      %p176 = por %p174, %p175
      %p177 = scmp.ne.s32.totalorder %s168, %s169
      %p178 = scmp.eq.s32.totalorder %s32, 0
      %p179 = por %p177, %p178
      %p180 = scmp.ne.s32.totalorder %s168, %s169
      %p181 = scmp.eq.s32.totalorder %s33, 1
      %p182 = por %p180, %p181
      %p184 = scmp.ne.s32.totalorder %s169, %s183
      %p185 = scmp.eq.s32.totalorder %s33, 0
      %p186 = por %p184, %p185
      %s188 = sadd.s32 %s187, 1
      %p191 = scmp.eq.s32.totalorder %s27, 1
      %p192 = scmp.ne.s32.totalorder %s187, %s189
      %p193 = scmp.eq.s32.totalorder %s27, 0
      %p194 = por %p192, %p193
      %p195 = scmp.ne.s32.totalorder %s187, %s189
      %p196 = scmp.eq.s32.totalorder %s32, 1
      %p197 = por %p195, %p196
      %p198 = scmp.ne.s32.totalorder %s189, %s190
      %p199 = scmp.eq.s32.totalorder %s32, 0
      %p200 = por %p198, %p199
      %p201 = scmp.ne.s32.totalorder %s189, %s190
      %p202 = scmp.eq.s32.totalorder %s33, 1
      %p203 = por %p201, %p202
      %p205 = scmp.ne.s32.totalorder %s190, %s204
      %p206 = scmp.eq.s32.totalorder %s33, 0
      %p207 = por %p205, %p206
      %s209 = sadd.s32 %s208, 1
      %p212 = scmp.eq.s32.totalorder %s27, 1
      %p213 = scmp.ne.s32.totalorder %s208, %s210
      %p214 = scmp.eq.s32.totalorder %s27, 0
      %p215 = por %p213, %p214
      %p216 = scmp.ne.s32.totalorder %s208, %s210
      %p217 = scmp.eq.s32.totalorder %s32, 1
      %p218 = por %p216, %p217
      %p219 = scmp.ne.s32.totalorder %s210, %s211
      %p220 = scmp.eq.s32.totalorder %s32, 0
      %p221 = por %p219, %p220
      %p222 = scmp.ne.s32.totalorder %s210, %s211
      %p223 = scmp.eq.s32.totalorder %s33, 1
      %p224 = por %p222, %p223
      %p226 = scmp.ne.s32.totalorder %s211, %s225
      %p227 = scmp.eq.s32.totalorder %s33, 0
      %p228 = por %p226, %p227
      %s230 = sadd.s32 %s229, 1
      %p233 = scmp.eq.s32.totalorder %s27, 1
      %p234 = scmp.ne.s32.totalorder %s229, %s231
      %p235 = scmp.eq.s32.totalorder %s27, 0
      %p236 = por %p234, %p235
      %p237 = scmp.ne.s32.totalorder %s229, %s231
      %p238 = scmp.eq.s32.totalorder %s32, 1
      %p239 = por %p237, %p238
      %p240 = scmp.ne.s32.totalorder %s231, %s232
      %p241 = scmp.eq.s32.totalorder %s32, 0
      %p242 = por %p240, %p241
      %p243 = scmp.ne.s32.totalorder %s231, %s232
      %p244 = scmp.eq.s32.totalorder %s33, 1
      %p245 = por %p243, %p244
      %p247 = scmp.ne.s32.totalorder %s232, %s246
      %p248 = scmp.eq.s32.totalorder %s33, 0
      %p249 = por %p247, %p248
      %s251 = sadd.s32 %s250, 1
      %p254 = scmp.eq.s32.totalorder %s27, 1
      %p255 = scmp.ne.s32.totalorder %s250, %s252
      %p256 = scmp.eq.s32.totalorder %s27, 0
      %p257 = por %p255, %p256
      %p258 = scmp.ne.s32.totalorder %s250, %s252
      %p259 = scmp.eq.s32.totalorder %s32, 1
      %p260 = por %p258, %p259
      %p261 = scmp.ne.s32.totalorder %s252, %s253
      %p262 = scmp.eq.s32.totalorder %s32, 0
      %p263 = por %p261, %p262
      %p264 = scmp.ne.s32.totalorder %s252, %s253
      %p265 = scmp.eq.s32.totalorder %s33, 1
      %p266 = por %p264, %p265
      %p268 = scmp.ne.s32.totalorder %s253, %s267
      %p269 = scmp.eq.s32.totalorder %s33, 0
      %p270 = por %p268, %p269
      %s272 = sadd.s32 %s271, 1
      %p275 = scmp.eq.s32.totalorder %s27, 1
      %p276 = scmp.ne.s32.totalorder %s271, %s273
      %p277 = scmp.eq.s32.totalorder %s27, 0
      %p278 = por %p276, %p277
      %p279 = scmp.ne.s32.totalorder %s271, %s273
      %p280 = scmp.eq.s32.totalorder %s32, 1
      %p281 = por %p279, %p280
      %p282 = scmp.ne.s32.totalorder %s273, %s274
      %p283 = scmp.eq.s32.totalorder %s32, 0
      %p284 = por %p282, %p283
      %p285 = scmp.ne.s32.totalorder %s273, %s274
      %p286 = scmp.eq.s32.totalorder %s33, 1
      %p287 = por %p285, %p286
      %p289 = scmp.ne.s32.totalorder %s274, %s288
      %p290 = scmp.eq.s32.totalorder %s33, 0
      %p291 = por %p289, %p290
      %s293 = sadd.s32 %s292, 1
      %p296 = scmp.eq.s32.totalorder %s27, 1
      %p297 = scmp.ne.s32.totalorder %s292, %s294
      %p298 = scmp.eq.s32.totalorder %s27, 0
      %p299 = por %p297, %p298
      %p300 = scmp.ne.s32.totalorder %s292, %s294
      %p301 = scmp.eq.s32.totalorder %s32, 1
      %p302 = por %p300, %p301
      %p303 = scmp.ne.s32.totalorder %s294, %s295
      %p304 = scmp.eq.s32.totalorder %s32, 0
      %p305 = por %p303, %p304
      %p306 = scmp.ne.s32.totalorder %s294, %s295
      %p307 = scmp.eq.s32.totalorder %s33, 1
      %p308 = por %p306, %p307
      %p310 = scmp.ne.s32.totalorder %s295, %s309
      %p311 = scmp.eq.s32.totalorder %s33, 0
      %p312 = por %p310, %p311
      %s314 = sadd.s32 %s313, 1
      %p317 = scmp.eq.s32.totalorder %s27, 1
      %p318 = scmp.ne.s32.totalorder %s313, %s315
      %p319 = scmp.eq.s32.totalorder %s27, 0
      %p320 = por %p318, %p319
      %p321 = scmp.ne.s32.totalorder %s313, %s315
      %p322 = scmp.eq.s32.totalorder %s32, 1
      %p323 = por %p321, %p322
      %p324 = scmp.ne.s32.totalorder %s315, %s316
      %p325 = scmp.eq.s32.totalorder %s32, 0
      %p326 = por %p324, %p325
      %p327 = scmp.ne.s32.totalorder %s315, %s316
      %p328 = scmp.eq.s32.totalorder %s33, 1
      %p329 = por %p327, %p328
      %p331 = scmp.ne.s32.totalorder %s316, %s330
      %p332 = scmp.eq.s32.totalorder %s33, 0
      %p333 = por %p331, %p332
      %s335 = sadd.s32 %s334, 1
      %p338 = scmp.eq.s32.totalorder %s27, 1
      %p339 = scmp.ne.s32.totalorder %s334, %s336
      %p340 = scmp.eq.s32.totalorder %s27, 0
      %p341 = por %p339, %p340
      %p342 = scmp.ne.s32.totalorder %s334, %s336
      %p343 = scmp.eq.s32.totalorder %s32, 1
      %p344 = por %p342, %p343
      %p345 = scmp.ne.s32.totalorder %s336, %s337
      %p346 = scmp.eq.s32.totalorder %s32, 0
      %p347 = por %p345, %p346
      %p348 = scmp.ne.s32.totalorder %s336, %s337
      %p349 = scmp.eq.s32.totalorder %s33, 1
      %p350 = por %p348, %p349
      %p352 = scmp.ne.s32.totalorder %s337, %s351
      %p353 = scmp.eq.s32.totalorder %s33, 0
      %p354 = por %p352, %p353
      %s355 = ssub.s32 %s27, %s34
      %p356 = scmp.eq.s32.totalorder %s355, 0
      %s358 = sadd.s32 %s357, 1
      %s359 = scalar_select %p356, %s357, %s358
      %p362 = pneg %p356
      %p363 = scmp.eq.s32.totalorder %s27, 1
      %p364 = por %p362, %p363
      %p365 = scmp.ne.s32.totalorder %s357, %s360
      %p366 = scmp.eq.s32.totalorder %s27, 0
      %p367 = por %p365, %p366
      %p368 = scmp.ne.s32.totalorder %s357, %s360
      %p369 = scmp.eq.s32.totalorder %s32, 1
      %p370 = por %p368, %p369
      %p371 = scmp.ne.s32.totalorder %s360, %s361
      %p372 = scmp.eq.s32.totalorder %s32, 0
      %p373 = por %p371, %p372
      %p374 = scmp.ne.s32.totalorder %s360, %s361
      %p375 = scmp.eq.s32.totalorder %s33, 1
      %p376 = por %p374, %p375
      %p378 = scmp.ne.s32.totalorder %s361, %s377
      %p379 = scmp.eq.s32.totalorder %s33, 0
      %p380 = por %p378, %p379
      %p381 = scmp.le.s32.totalorder 1, %s27
      %p382 = scmp.lt.s32.totalorder %s27, 3
      %p383 = pnand %p381, %p382
      %p384 = pneg %p383
      // Predicated region
      $region9: #{_lambda_.1} parent=5 // pred_check
        _
      $region10: #{_lambda_.1} parent=5 // pred_check_branch
        %386 = sbr.rel (%p383) target = $region12
      $region11: #{_lambda_.1} parent=5 // pred_region
        %s387 = ssub.s32 %s27, 1
        // Predicated region
        $region13: #{_lambda_.1} parent=11 // pred_check
          %p388 = pneg %p74
        $region14: #{_lambda_.1} parent=11 // pred_check_branch
          %390 = sbr.rel (%p388) target = $region16
        $region15: #{_lambda_.1} parent=11 // pred_region
          %s392 = ssub.s32 2048, 2048
          %393 = vsyncadd [#allocation4], %s392
          %s394 = sshll.u32 [#allocation3], 4
          %s395 = int_to_ptr.vmem [resolvable:$true] %s394
          %400 = dma.hbm_to_vmem [thread:$0]  %s1, 2048, %s395, [#allocation4], 64, 64, 4
        $region16: #{_lambda_.1} parent=11 // pred_fallthru
          _
        // Predicated region
        $region17: #{_lambda_.1} parent=11 // pred_check
          %p401 = pneg %p95
        $region18: #{_lambda_.1} parent=11 // pred_check_branch
          %403 = sbr.rel (%p401) target = $region20
        $region19: #{_lambda_.1} parent=11 // pred_region
          %s405 = ssub.s32 16, 16
          %406 = vsyncadd [#allocation6], %s405
          %s408 = sshll.u32 [#allocation5], 4
          %s409 = int_to_ptr.vmem [resolvable:$true] %s408
          %411 = dma.hbm_to_vmem [thread:$0]  %s2, 16, %s409, [#allocation6]
        $region20: #{_lambda_.1} parent=11 // pred_fallthru
          _
        // Predicated region
        $region21: #{_lambda_.1} parent=11 // pred_check
          %p412 = pneg %p116
        $region22: #{_lambda_.1} parent=11 // pred_check_branch
          %414 = sbr.rel (%p412) target = $region24
        $region23: #{_lambda_.1} parent=11 // pred_region
          %s416 = ssub.s32 2048, 2048
          %417 = vsyncadd [#allocation6], %s416
          %s418 = sshll.u32 [#allocation7], 4
          %s419 = int_to_ptr.vmem [resolvable:$true] %s418
          %424 = dma.hbm_to_vmem [thread:$0]  %s3, 2048, %s419, [#allocation6], 64, 64, 4
        $region24: #{_lambda_.1} parent=11 // pred_fallthru
          _
        // Predicated region
        $region25: #{_lambda_.1} parent=11 // pred_check
          %p425 = pneg %p137
        $region26: #{_lambda_.1} parent=11 // pred_check_branch
          %427 = sbr.rel (%p425) target = $region28
        $region27: #{_lambda_.1} parent=11 // pred_region
          %s429 = ssub.s32 16, 16
          %430 = vsyncadd [#allocation9], %s429
          %s432 = sshll.u32 [#allocation8], 4
          %s433 = int_to_ptr.vmem [resolvable:$true] %s432
          %435 = dma.hbm_to_vmem [thread:$0]  %s4, 16, %s433, [#allocation9]
        $region28: #{_lambda_.1} parent=11 // pred_fallthru
          _
        // Predicated region
        $region29: #{_lambda_.1} parent=11 // pred_check
          %p436 = pneg %p158
        $region30: #{_lambda_.1} parent=11 // pred_check_branch
          %438 = sbr.rel (%p436) target = $region32
        $region31: #{_lambda_.1} parent=11 // pred_region
          %s440 = ssub.s32 1024, 1024
          %441 = vsyncadd [#allocation9], %s440
          %s442 = sshll.u32 [#allocation10], 4
          %s443 = int_to_ptr.vmem [resolvable:$true] %s442
          %448 = dma.hbm_to_vmem [thread:$0]  %s5, 1024, %s443, [#allocation9], 64, 64, 4
        $region32: #{_lambda_.1} parent=11 // pred_fallthru
          _
        // Predicated region
        $region33: #{_lambda_.1} parent=11 // pred_check
          %p449 = pneg %p179
        $region34: #{_lambda_.1} parent=11 // pred_check_branch
          %451 = sbr.rel (%p449) target = $region36
        $region35: #{_lambda_.1} parent=11 // pred_region
          %s453 = ssub.s32 16, 16
          %454 = vsyncadd [#allocation12], %s453
          %s456 = sshll.u32 [#allocation11], 4
          %s457 = int_to_ptr.vmem [resolvable:$true] %s456
          %459 = dma.hbm_to_vmem [thread:$0]  %s6, 16, %s457, [#allocation12]
        $region36: #{_lambda_.1} parent=11 // pred_fallthru
          _
        // Predicated region
        $region37: #{_lambda_.1} parent=11 // pred_check
          %p460 = pneg %p200
        $region38: #{_lambda_.1} parent=11 // pred_check_branch
          %462 = sbr.rel (%p460) target = $region40
        $region39: #{_lambda_.1} parent=11 // pred_region
          %s464 = ssub.s32 2048, 2048
          %465 = vsyncadd [#allocation12], %s464
          %s466 = sshll.u32 [#allocation13], 4
          %s467 = int_to_ptr.vmem [resolvable:$true] %s466
          %472 = dma.hbm_to_vmem [thread:$0]  %s7, 2048, %s467, [#allocation12], 64, 64, 4
        $region40: #{_lambda_.1} parent=11 // pred_fallthru
          _
        // Predicated region
        $region41: #{_lambda_.1} parent=11 // pred_check
          %p473 = pneg %p221
        $region42: #{_lambda_.1} parent=11 // pred_check_branch
          %475 = sbr.rel (%p473) target = $region44
        $region43: #{_lambda_.1} parent=11 // pred_region
          %s477 = ssub.s32 16, 16
          %478 = vsyncadd [#allocation15], %s477
          %s480 = sshll.u32 [#allocation14], 4
          %s481 = int_to_ptr.vmem [resolvable:$true] %s480
          %483 = dma.hbm_to_vmem [thread:$0]  %s8, 16, %s481, [#allocation15]
        $region44: #{_lambda_.1} parent=11 // pred_fallthru
          _
        // Predicated region
        $region45: #{_lambda_.1} parent=11 // pred_check
          %p484 = pneg %p242
        $region46: #{_lambda_.1} parent=11 // pred_check_branch
          %486 = sbr.rel (%p484) target = $region48
        $region47: #{_lambda_.1} parent=11 // pred_region
          %s488 = ssub.s32 2048, 2048
          %489 = vsyncadd [#allocation15], %s488
          %s490 = sshll.u32 [#allocation16], 4
          %s491 = int_to_ptr.vmem [resolvable:$true] %s490
          %496 = dma.hbm_to_vmem [thread:$0]  %s9, 2048, %s491, [#allocation15], 64, 64, 4
        $region48: #{_lambda_.1} parent=11 // pred_fallthru
          _
        // Predicated region
        $region49: #{_lambda_.1} parent=11 // pred_check
          %p497 = pneg %p263
        $region50: #{_lambda_.1} parent=11 // pred_check_branch
          %499 = sbr.rel (%p497) target = $region52
        $region51: #{_lambda_.1} parent=11 // pred_region
          %s501 = ssub.s32 16, 16
          %502 = vsyncadd [#allocation18], %s501
          %s504 = sshll.u32 [#allocation17], 4
          %s505 = int_to_ptr.vmem [resolvable:$true] %s504
          %507 = dma.hbm_to_vmem [thread:$0]  %s10, 16, %s505, [#allocation18]
        $region52: #{_lambda_.1} parent=11 // pred_fallthru
          _
        // Predicated region
        $region53: #{_lambda_.1} parent=11 // pred_check
          %p508 = pneg %p284
        $region54: #{_lambda_.1} parent=11 // pred_check_branch
          %510 = sbr.rel (%p508) target = $region56
        $region55: #{_lambda_.1} parent=11 // pred_region
          %s512 = ssub.s32 2048, 2048
          %513 = vsyncadd [#allocation18], %s512
          %s514 = sshll.u32 [#allocation19], 4
          %s515 = int_to_ptr.vmem [resolvable:$true] %s514
          %520 = dma.hbm_to_vmem [thread:$0]  %s11, 2048, %s515, [#allocation18], 64, 64, 4
        $region56: #{_lambda_.1} parent=11 // pred_fallthru
          _
        // Predicated region
        $region57: #{_lambda_.1} parent=11 // pred_check
          %p521 = pneg %p305
        $region58: #{_lambda_.1} parent=11 // pred_check_branch
          %523 = sbr.rel (%p521) target = $region60
        $region59: #{_lambda_.1} parent=11 // pred_region
          _
        $region60: #{_lambda_.1} parent=11 // pred_fallthru
          _
        // Predicated region
        $region61: #{_lambda_.1} parent=11 // pred_check
          %p524 = pneg %p326
        $region62: #{_lambda_.1} parent=11 // pred_check_branch
          %526 = sbr.rel (%p524) target = $region64
        $region63: #{_lambda_.1} parent=11 // pred_region
          _
        $region64: #{_lambda_.1} parent=11 // pred_fallthru
          _
        // Predicated region
        $region65: #{_lambda_.1} parent=11 // pred_check
          %p527 = pneg %p347
        $region66: #{_lambda_.1} parent=11 // pred_check_branch
          %529 = sbr.rel (%p527) target = $region68
        $region67: #{_lambda_.1} parent=11 // pred_region
          _
        $region68: #{_lambda_.1} parent=11 // pred_fallthru
          _
      $region12: #{_lambda_.1} parent=5 // pred_fallthru
        _
      %p530 = scmp.lt.s32.totalorder %s27, 2
      // Predicated region
      $region69: #{_lambda_.1} parent=5 // pred_check
        %p531 = pneg %p530
      $region70: #{_lambda_.1} parent=5 // pred_check_branch
        %533 = sbr.rel (%p531) target = $region72
      $region71: #{_lambda_.1} parent=5 // pred_region
        // Predicated region
        $region73: #{_lambda_.1} parent=71 // pred_check
          %p534 = pneg %p47
        $region74: #{_lambda_.1} parent=71 // pred_check_branch
          %536 = sbr.rel (%p534) target = $region76
        $region75: #{_lambda_.1} parent=71 // pred_region
          %p537 = scmp.lt.s32.totalorder %s27, 1
          %s538 = scalar_select %p537, %s27, 1
          %s539 = smul.addr %s538, 2
          %s540 = smul.addr %s539, 8
          %s541 = scalar_lea.vmem %s0, %s540
        $region76: #{_lambda_.1} parent=71 // pred_fallthru
          _
      $region72: #{_lambda_.1} parent=5 // pred_fallthru
        _
      %p542 = scmp.le.s32.totalorder 1, %s27
      %p543 = scmp.lt.s32.totalorder %s27, 3
      %p544 = pnand %p542, %p543
      %p545 = pneg %p544
      // Predicated region
      $region77: #{_lambda_.1} parent=5 // pred_check
        _
      $region78: #{_lambda_.1} parent=5 // pred_check_branch
        %547 = sbr.rel (%p544) target = $region80
      $region79: #{_lambda_.1} parent=5 // pred_region
        %s548 = ssub.s32 %s27, 1
        // Predicated region
        $region81: #{_lambda_.1} parent=79 // pred_check
          %p549 = pneg %p74
        $region82: #{_lambda_.1} parent=79 // pred_check_branch
          %551 = sbr.rel (%p549) target = $region84
        $region83: #{_lambda_.1} parent=79 // pred_region
          %552 = dma.done [#allocation4], 2048
        $region84: #{_lambda_.1} parent=79 // pred_fallthru
          _
        // Predicated region
        $region85: #{_lambda_.1} parent=79 // pred_check
          %p553 = pneg %p95
        $region86: #{_lambda_.1} parent=79 // pred_check_branch
          %555 = sbr.rel (%p553) target = $region88
        $region87: #{_lambda_.1} parent=79 // pred_region
          %556 = dma.done [#allocation6], 16
        $region88: #{_lambda_.1} parent=79 // pred_fallthru
          _
        // Predicated region
        $region89: #{_lambda_.1} parent=79 // pred_check
          %p557 = pneg %p116
        $region90: #{_lambda_.1} parent=79 // pred_check_branch
          %559 = sbr.rel (%p557) target = $region92
        $region91: #{_lambda_.1} parent=79 // pred_region
          %560 = dma.done [#allocation6], 2048
        $region92: #{_lambda_.1} parent=79 // pred_fallthru
          _
        // Predicated region
        $region93: #{_lambda_.1} parent=79 // pred_check
          %p561 = pneg %p137
        $region94: #{_lambda_.1} parent=79 // pred_check_branch
          %563 = sbr.rel (%p561) target = $region96
        $region95: #{_lambda_.1} parent=79 // pred_region
          %564 = dma.done [#allocation9], 16
        $region96: #{_lambda_.1} parent=79 // pred_fallthru
          _
        // Predicated region
        $region97: #{_lambda_.1} parent=79 // pred_check
          %p565 = pneg %p158
        $region98: #{_lambda_.1} parent=79 // pred_check_branch
          %567 = sbr.rel (%p565) target = $region100
        $region99: #{_lambda_.1} parent=79 // pred_region
          %568 = dma.done [#allocation9], 1024
        $region100: #{_lambda_.1} parent=79 // pred_fallthru
          _
        // Predicated region
        $region101: #{_lambda_.1} parent=79 // pred_check
          %p569 = pneg %p179
        $region102: #{_lambda_.1} parent=79 // pred_check_branch
          %571 = sbr.rel (%p569) target = $region104
        $region103: #{_lambda_.1} parent=79 // pred_region
          %572 = dma.done [#allocation12], 16
        $region104: #{_lambda_.1} parent=79 // pred_fallthru
          _
        // Predicated region
        $region105: #{_lambda_.1} parent=79 // pred_check
          %p573 = pneg %p200
        $region106: #{_lambda_.1} parent=79 // pred_check_branch
          %575 = sbr.rel (%p573) target = $region108
        $region107: #{_lambda_.1} parent=79 // pred_region
          %576 = dma.done [#allocation12], 2048
        $region108: #{_lambda_.1} parent=79 // pred_fallthru
          _
        // Predicated region
        $region109: #{_lambda_.1} parent=79 // pred_check
          %p577 = pneg %p221
        $region110: #{_lambda_.1} parent=79 // pred_check_branch
          %579 = sbr.rel (%p577) target = $region112
        $region111: #{_lambda_.1} parent=79 // pred_region
          %580 = dma.done [#allocation15], 16
        $region112: #{_lambda_.1} parent=79 // pred_fallthru
          _
        // Predicated region
        $region113: #{_lambda_.1} parent=79 // pred_check
          %p581 = pneg %p242
        $region114: #{_lambda_.1} parent=79 // pred_check_branch
          %583 = sbr.rel (%p581) target = $region116
        $region115: #{_lambda_.1} parent=79 // pred_region
          %584 = dma.done [#allocation15], 2048
        $region116: #{_lambda_.1} parent=79 // pred_fallthru
          _
        // Predicated region
        $region117: #{_lambda_.1} parent=79 // pred_check
          %p585 = pneg %p263
        $region118: #{_lambda_.1} parent=79 // pred_check_branch
          %587 = sbr.rel (%p585) target = $region120
        $region119: #{_lambda_.1} parent=79 // pred_region
          %588 = dma.done [#allocation18], 16
        $region120: #{_lambda_.1} parent=79 // pred_fallthru
          _
        // Predicated region
        $region121: #{_lambda_.1} parent=79 // pred_check
          %p589 = pneg %p284
        $region122: #{_lambda_.1} parent=79 // pred_check_branch
          %591 = sbr.rel (%p589) target = $region124
        $region123: #{_lambda_.1} parent=79 // pred_region
          %592 = dma.done [#allocation18], 2048
        $region124: #{_lambda_.1} parent=79 // pred_fallthru
          _
        %p593 = scmp.lt.s32.totalorder %s32, 1
        %s594 = scalar_select %p593, %s32, 1
        %s595 = smul.addr %s594, 2
        %s596 = smul.addr %s595, 8
        %s597 = scalar_lea.vmem %s0, %s596
        %p598 = pneg %p53
        %p599 = pneg %p50
        %p600 = pneg %p74
        %p601 = pneg %p71
        %p602 = pneg %p95
        %p603 = pneg %p92
        %p604 = pneg %p116
        %p605 = pneg %p113
        %p606 = pneg %p137
        %p607 = pneg %p134
        %p608 = pneg %p158
        %p609 = pneg %p155
        %p610 = pneg %p179
        %p611 = pneg %p176
        %p612 = pneg %p200
        %p613 = pneg %p197
        %p614 = pneg %p221
        %p615 = pneg %p218
        %p616 = pneg %p242
        %p617 = pneg %p239
        %p618 = pneg %p263
        %p619 = pneg %p260
        %p620 = pneg %p284
        %p621 = pneg %p281
        %p622 = pneg %p305
        %p623 = pneg %p302
        %p624 = pneg %p326
        %p625 = pneg %p323
        %p626 = pneg %p347
        %p627 = pneg %p344
        %p628 = pneg %p373
        %p629 = pneg %p370
        %p630 = scmp.lt.s32.totalorder %s32, 1
        %s631 = scalar_select %p630, %s32, 1
        %s632 = smul.addr %s631, 2
        %s633 = smul.addr %s632, 8
        %s634 = scalar_lea.vmem %s15, %s633
        %p635 = scmp.lt.s32.totalorder %s32, 1
        %s636 = scalar_select %p635, %s32, 1
        %s637 = smul.addr %s636, 2
        %s638 = smul.addr %s637, 8
        %s639 = scalar_lea.vmem %s0, %s638
        %p640 = scmp.lt.s32.totalorder %s32, 1
        %s641 = scalar_select %p640, %s32, 1
        %s642 = smul.addr %s641, 2
        %s643 = smul.addr %s642, 8
        %s644 = scalar_lea.vmem %s15, %s643
        %646 = vst [vmem:[#allocation2] sm:$0xff] 0.0
        %v647 = vld [vmem:[%s639] sm:$0xff]
        %v648 = vld [vmem:[%s639 + $0x8] sm:$0xff]
        %649 = vst [vmem:[#allocation2 + $0x8] sm:$0xff] %v647
        %650 = vst [vmem:[#allocation2 + $0x10] sm:$0xff] %v648
        %v651 = vld [vmem:[#allocation2 + $0x7] sm:$0xff]
        %v652 = vld [vmem:[#allocation2 + $0xf] sm:$0xff]
        %v653 = vpack.c.bf16 %v652, %v651
        %v654 = vpack.c.bf16 %v648, %v647
        %v655 = vld [vmem:[#allocation3] sm:$0xf]
        %v656 = vld [vmem:[#allocation3 + $0x4] sm:$0xf]
        %v657 = vld [vmem:[#allocation3 + $0x8] sm:$0xf]
        %v658 = vld [vmem:[#allocation3 + $0xc] sm:$0xf]
        %v659 = vld [vmem:[#allocation3 + $0x10] sm:$0xf]
        %v660 = vld [vmem:[#allocation3 + $0x14] sm:$0xf]
        %v661 = vld [vmem:[#allocation3 + $0x18] sm:$0xf]
        %v662 = vld [vmem:[#allocation3 + $0x1c] sm:$0xf]
        %v663 = vld [vmem:[#allocation3 + $0x20] sm:$0xf]
        %v664 = vld [vmem:[#allocation3 + $0x24] sm:$0xf]
        %v665 = vld [vmem:[#allocation3 + $0x28] sm:$0xf]
        %v666 = vld [vmem:[#allocation3 + $0x2c] sm:$0xf]
        %v667 = vld [vmem:[#allocation3 + $0x30] sm:$0xf]
        %v668 = vld [vmem:[#allocation3 + $0x34] sm:$0xf]
        %v669 = vld [vmem:[#allocation3 + $0x38] sm:$0xf]
        %v670 = vld [vmem:[#allocation3 + $0x3c] sm:$0xf]
        %v671 = vld [vmem:[#allocation3 + $0x40] sm:$0xf]
        %v672 = vld [vmem:[#allocation3 + $0x44] sm:$0xf]
        %v673 = vld [vmem:[#allocation3 + $0x48] sm:$0xf]
        %v674 = vld [vmem:[#allocation3 + $0x4c] sm:$0xf]
        %v675 = vld [vmem:[#allocation3 + $0x50] sm:$0xf]
        %v676 = vld [vmem:[#allocation3 + $0x54] sm:$0xf]
        %v677 = vld [vmem:[#allocation3 + $0x58] sm:$0xf]
        %v678 = vld [vmem:[#allocation3 + $0x5c] sm:$0xf]
        %v679 = vld [vmem:[#allocation3 + $0x60] sm:$0xf]
        %v680 = vld [vmem:[#allocation3 + $0x64] sm:$0xf]
        %v681 = vld [vmem:[#allocation3 + $0x68] sm:$0xf]
        %v682 = vld [vmem:[#allocation3 + $0x6c] sm:$0xf]
        %v683 = vld [vmem:[#allocation3 + $0x70] sm:$0xf]
        %v684 = vld [vmem:[#allocation3 + $0x74] sm:$0xf]
        %v685 = vld [vmem:[#allocation3 + $0x78] sm:$0xf]
        %v686 = vld [vmem:[#allocation3 + $0x7c] sm:$0xf]
        %v687 = vld [vmem:[#allocation5] sm:$0x1]
        %v689 = vlaneseq
        %v690 = vshrl.u32 %v689, 7
        %v691 = vsub.s32 0, %v690
        %v692 = vrot.slane %v687, %v691
        %v726 = vunpack.c.l.b16 %v655
        %v727 = vunpack.c.l.b16 %v656
        %v728 = vunpack.c.l.b16 %v657
        %v729 = vunpack.c.l.b16 %v658
        %v730 = vunpack.c.l.b16 %v659
        %v731 = vunpack.c.l.b16 %v660
        %v732 = vunpack.c.l.b16 %v661
        %v733 = vunpack.c.l.b16 %v662
        %v734 = vunpack.c.l.b16 %v663
        %v735 = vunpack.c.l.b16 %v664
        %v736 = vunpack.c.l.b16 %v665
        %v737 = vunpack.c.l.b16 %v666
        %v738 = vunpack.c.l.b16 %v667
        %v739 = vunpack.c.l.b16 %v668
        %v740 = vunpack.c.l.b16 %v669
        %v741 = vunpack.c.l.b16 %v670
        %v742 = vunpack.c.l.b16 %v671
        %v743 = vunpack.c.l.b16 %v672
        %v744 = vunpack.c.l.b16 %v673
        %v745 = vunpack.c.l.b16 %v674
        %v746 = vunpack.c.l.b16 %v675
        %v747 = vunpack.c.l.b16 %v676
        %v748 = vunpack.c.l.b16 %v677
        %v749 = vunpack.c.l.b16 %v678
        %v750 = vunpack.c.l.b16 %v679
        %v751 = vunpack.c.l.b16 %v680
        %v752 = vunpack.c.l.b16 %v681
        %v753 = vunpack.c.l.b16 %v682
        %v754 = vunpack.c.l.b16 %v683
        %v755 = vunpack.c.l.b16 %v684
        %v756 = vunpack.c.l.b16 %v685
        %v757 = vunpack.c.l.b16 %v686
        %v758 = vpack.c.b16 %v727, %v726
        %v759 = vpack.c.b16 %v729, %v728
        %v760 = vpack.c.b16 %v731, %v730
        %v761 = vpack.c.b16 %v733, %v732
        %v762 = vpack.c.b16 %v735, %v734
        %v763 = vpack.c.b16 %v737, %v736
        %v764 = vpack.c.b16 %v739, %v738
        %v765 = vpack.c.b16 %v741, %v740
        %v766 = vpack.c.b16 %v743, %v742
        %v767 = vpack.c.b16 %v745, %v744
        %v768 = vpack.c.b16 %v747, %v746
        %v769 = vpack.c.b16 %v749, %v748
        %v770 = vpack.c.b16 %v751, %v750
        %v771 = vpack.c.b16 %v753, %v752
        %v772 = vpack.c.b16 %v755, %v754
        %v773 = vpack.c.b16 %v757, %v756
        %790 = vmatprep.subr.bf16.mxu0 0
        %791 = vmatpush1.bf16.msra.mxu0 %v765
        %792 = vmatprep.subr.bf16.mxu0 0
        %793 = vmatpush1.bf16.msra.mxu0 %v764
        %794 = vmatprep.subr.bf16.mxu0 0
        %795 = vmatpush1.bf16.msra.mxu0 %v763
        %796 = vmatprep.subr.bf16.mxu0 0
        %797 = vmatpush1.bf16.msra.mxu0 %v762
        %798 = vmatprep.subr.bf16.mxu0 0
        %799 = vmatpush1.bf16.msra.mxu0 %v761
        %800 = vmatprep.subr.bf16.mxu0 0
        %801 = vmatpush1.bf16.msra.mxu0 %v760
        %802 = vmatprep.subr.bf16.mxu0 0
        %803 = vmatpush1.bf16.msra.mxu0 %v759
        %804 = vmatprep.subr.bf16.mxu0 0
        %805 = vmatpush1.bf16.msra.mxu0 %v758
        %806 = vmatprep.subr.bf16.mxu0 0
        %807 = vmatpush2.bf16.msra.mxu0 %v773
        %808 = vmatprep.subr.bf16.mxu0 0
        %809 = vmatpush2.bf16.msra.mxu0 %v772
        %810 = vmatprep.subr.bf16.mxu0 0
        %811 = vmatpush2.bf16.msra.mxu0 %v771
        %812 = vmatprep.subr.bf16.mxu0 0
        %813 = vmatpush2.bf16.msra.mxu0 %v770
        %814 = vmatprep.subr.bf16.mxu0 0
        %815 = vmatpush2.bf16.msra.mxu0 %v769
        %816 = vmatprep.subr.bf16.mxu0 0
        %817 = vmatpush2.bf16.msra.mxu0 %v768
        %818 = vmatprep.subr.bf16.mxu0 0
        %819 = vmatpush2.bf16.msra.mxu0 %v767
        %820 = vmatprep.subr.bf16.mxu0 0
        %821 = vmatpush2.bf16.msra.mxu0 %v766
        %822 = vmatprep.mubr.bf16.mxu0 %v654
        %823 = vmatmul.mubr.bf16.gmra.mxu0 %v653
        %v824 = vpop.f32.mrf.mxu0
        %v825 = vadd.f32 %v692, %v824
        %v826 = vpop.f32.mrf.mxu0
        %v827 = vpop.f32.mrf.mxu0
        %v828 = vadd.f32 %v692, %v827
        %v829 = vpop.f32.mrf.mxu0
        %830 = vdwg.mxu0
        %v831 = vmax.f32 %v825, 0.0
        %v832 = vmax.f32 %v828, 0.0
        %833 = vst [vmem:[#allocation2 + $0x8] sm:$0xff] %v831
        %834 = vst [vmem:[#allocation2 + $0x10] sm:$0xff] %v832
        %v835 = vld [vmem:[#allocation2 + $0x7] sm:$0xff]
        %v836 = vld [vmem:[#allocation2 + $0xf] sm:$0xff]
        %v837 = vpack.c.bf16 %v836, %v835
        %v838 = vpack.c.bf16 %v832, %v831
        %v839 = vld [vmem:[#allocation7] sm:$0xf]
        %v840 = vld [vmem:[#allocation7 + $0x4] sm:$0xf]
        %v841 = vld [vmem:[#allocation7 + $0x8] sm:$0xf]
        %v842 = vld [vmem:[#allocation7 + $0xc] sm:$0xf]
        %v843 = vld [vmem:[#allocation7 + $0x10] sm:$0xf]
        %v844 = vld [vmem:[#allocation7 + $0x14] sm:$0xf]
        %v845 = vld [vmem:[#allocation7 + $0x18] sm:$0xf]
        %v846 = vld [vmem:[#allocation7 + $0x1c] sm:$0xf]
        %v847 = vld [vmem:[#allocation7 + $0x20] sm:$0xf]
        %v848 = vld [vmem:[#allocation7 + $0x24] sm:$0xf]
        %v849 = vld [vmem:[#allocation7 + $0x28] sm:$0xf]
        %v850 = vld [vmem:[#allocation7 + $0x2c] sm:$0xf]
        %v851 = vld [vmem:[#allocation7 + $0x30] sm:$0xf]
        %v852 = vld [vmem:[#allocation7 + $0x34] sm:$0xf]
        %v853 = vld [vmem:[#allocation7 + $0x38] sm:$0xf]
        %v854 = vld [vmem:[#allocation7 + $0x3c] sm:$0xf]
        %v855 = vld [vmem:[#allocation7 + $0x40] sm:$0xf]
        %v856 = vld [vmem:[#allocation7 + $0x44] sm:$0xf]
        %v857 = vld [vmem:[#allocation7 + $0x48] sm:$0xf]
        %v858 = vld [vmem:[#allocation7 + $0x4c] sm:$0xf]
        %v859 = vld [vmem:[#allocation7 + $0x50] sm:$0xf]
        %v860 = vld [vmem:[#allocation7 + $0x54] sm:$0xf]
        %v861 = vld [vmem:[#allocation7 + $0x58] sm:$0xf]
        %v862 = vld [vmem:[#allocation7 + $0x5c] sm:$0xf]
        %v863 = vld [vmem:[#allocation7 + $0x60] sm:$0xf]
        %v864 = vld [vmem:[#allocation7 + $0x64] sm:$0xf]
        %v865 = vld [vmem:[#allocation7 + $0x68] sm:$0xf]
        %v866 = vld [vmem:[#allocation7 + $0x6c] sm:$0xf]
        %v867 = vld [vmem:[#allocation7 + $0x70] sm:$0xf]
        %v868 = vld [vmem:[#allocation7 + $0x74] sm:$0xf]
        %v869 = vld [vmem:[#allocation7 + $0x78] sm:$0xf]
        %v870 = vld [vmem:[#allocation7 + $0x7c] sm:$0xf]
        %v871 = vld [vmem:[#allocation8] sm:$0x1]
        %v873 = vlaneseq
        %v874 = vshrl.u32 %v873, 7
        %v875 = vsub.s32 0, %v874
        %v876 = vrot.slane %v871, %v875
        %v910 = vunpack.c.l.b16 %v839
        %v911 = vunpack.c.l.b16 %v840
        %v912 = vunpack.c.l.b16 %v841
        %v913 = vunpack.c.l.b16 %v842
        %v914 = vunpack.c.l.b16 %v843
        %v915 = vunpack.c.l.b16 %v844
        %v916 = vunpack.c.l.b16 %v845
        %v917 = vunpack.c.l.b16 %v846
        %v918 = vunpack.c.l.b16 %v847
        %v919 = vunpack.c.l.b16 %v848
        %v920 = vunpack.c.l.b16 %v849
        %v921 = vunpack.c.l.b16 %v850
        %v922 = vunpack.c.l.b16 %v851
        %v923 = vunpack.c.l.b16 %v852
        %v924 = vunpack.c.l.b16 %v853
        %v925 = vunpack.c.l.b16 %v854
        %v926 = vunpack.c.l.b16 %v855
        %v927 = vunpack.c.l.b16 %v856
        %v928 = vunpack.c.l.b16 %v857
        %v929 = vunpack.c.l.b16 %v858
        %v930 = vunpack.c.l.b16 %v859
        %v931 = vunpack.c.l.b16 %v860
        %v932 = vunpack.c.l.b16 %v861
        %v933 = vunpack.c.l.b16 %v862
        %v934 = vunpack.c.l.b16 %v863
        %v935 = vunpack.c.l.b16 %v864
        %v936 = vunpack.c.l.b16 %v865
        %v937 = vunpack.c.l.b16 %v866
        %v938 = vunpack.c.l.b16 %v867
        %v939 = vunpack.c.l.b16 %v868
        %v940 = vunpack.c.l.b16 %v869
        %v941 = vunpack.c.l.b16 %v870
        %v942 = vpack.c.b16 %v911, %v910
        %v943 = vpack.c.b16 %v913, %v912
        %v944 = vpack.c.b16 %v915, %v914
        %v945 = vpack.c.b16 %v917, %v916
        %v946 = vpack.c.b16 %v919, %v918
        %v947 = vpack.c.b16 %v921, %v920
        %v948 = vpack.c.b16 %v923, %v922
        %v949 = vpack.c.b16 %v925, %v924
        %v950 = vpack.c.b16 %v927, %v926
        %v951 = vpack.c.b16 %v929, %v928
        %v952 = vpack.c.b16 %v931, %v930
        %v953 = vpack.c.b16 %v933, %v932
        %v954 = vpack.c.b16 %v935, %v934
        %v955 = vpack.c.b16 %v937, %v936
        %v956 = vpack.c.b16 %v939, %v938
        %v957 = vpack.c.b16 %v941, %v940
        %974 = vmatprep.subr.bf16.mxu0 0
        %975 = vmatpush1.bf16.msra.mxu0 %v949
        %976 = vmatprep.subr.bf16.mxu0 0
        %977 = vmatpush1.bf16.msra.mxu0 %v948
        %978 = vmatprep.subr.bf16.mxu0 0
        %979 = vmatpush1.bf16.msra.mxu0 %v947
        %980 = vmatprep.subr.bf16.mxu0 0
        %981 = vmatpush1.bf16.msra.mxu0 %v946
        %982 = vmatprep.subr.bf16.mxu0 0
        %983 = vmatpush1.bf16.msra.mxu0 %v945
        %984 = vmatprep.subr.bf16.mxu0 0
        %985 = vmatpush1.bf16.msra.mxu0 %v944
        %986 = vmatprep.subr.bf16.mxu0 0
        %987 = vmatpush1.bf16.msra.mxu0 %v943
        %988 = vmatprep.subr.bf16.mxu0 0
        %989 = vmatpush1.bf16.msra.mxu0 %v942
        %990 = vmatprep.subr.bf16.mxu0 0
        %991 = vmatpush2.bf16.msra.mxu0 %v957
        %992 = vmatprep.subr.bf16.mxu0 0
        %993 = vmatpush2.bf16.msra.mxu0 %v956
        %994 = vmatprep.subr.bf16.mxu0 0
        %995 = vmatpush2.bf16.msra.mxu0 %v955
        %996 = vmatprep.subr.bf16.mxu0 0
        %997 = vmatpush2.bf16.msra.mxu0 %v954
        %998 = vmatprep.subr.bf16.mxu0 0
        %999 = vmatpush2.bf16.msra.mxu0 %v953
        %1000 = vmatprep.subr.bf16.mxu0 0
        %1001 = vmatpush2.bf16.msra.mxu0 %v952
        %1002 = vmatprep.subr.bf16.mxu0 0
        %1003 = vmatpush2.bf16.msra.mxu0 %v951
        %1004 = vmatprep.subr.bf16.mxu0 0
        %1005 = vmatpush2.bf16.msra.mxu0 %v950
        %1006 = vmatprep.mubr.bf16.mxu0 %v838
        %1007 = vmatmul.mubr.bf16.gmra.mxu0 %v837
        %v1008 = vpop.f32.mrf.mxu0
        %v1009 = vadd.f32 %v876, %v1008
        %v1010 = vpop.f32.mrf.mxu0
        %v1011 = vpop.f32.mrf.mxu0
        %v1012 = vadd.f32 %v876, %v1011
        %v1013 = vpop.f32.mrf.mxu0
        %1014 = vdwg.mxu0
        %v1015 = vmax.f32 %v1009, 0.0
        %v1016 = vmax.f32 %v1012, 0.0
        %v1017 = vld [vmem:[#allocation10] sm:$0xf]
        %v1018 = vld [vmem:[#allocation10 + $0x4] sm:$0xf]
        %v1019 = vld [vmem:[#allocation10 + $0x8] sm:$0xf]
        %v1020 = vld [vmem:[#allocation10 + $0xc] sm:$0xf]
        %v1021 = vld [vmem:[#allocation10 + $0x10] sm:$0xf]
        %v1022 = vld [vmem:[#allocation10 + $0x14] sm:$0xf]
        %v1023 = vld [vmem:[#allocation10 + $0x18] sm:$0xf]
        %v1024 = vld [vmem:[#allocation10 + $0x1c] sm:$0xf]
        %v1025 = vld [vmem:[#allocation10 + $0x20] sm:$0xf]
        %v1026 = vld [vmem:[#allocation10 + $0x24] sm:$0xf]
        %v1027 = vld [vmem:[#allocation10 + $0x28] sm:$0xf]
        %v1028 = vld [vmem:[#allocation10 + $0x2c] sm:$0xf]
        %v1029 = vld [vmem:[#allocation10 + $0x30] sm:$0xf]
        %v1030 = vld [vmem:[#allocation10 + $0x34] sm:$0xf]
        %v1031 = vld [vmem:[#allocation10 + $0x38] sm:$0xf]
        %v1032 = vld [vmem:[#allocation10 + $0x3c] sm:$0xf]
        %v1033 = vld [vmem:[#allocation11] sm:$0x1]
        %v1035 = vlaneseq
        %v1036 = vshrl.u32 %v1035, 7
        %v1037 = vsub.s32 0, %v1036
        %v1038 = vrot.slane %v1033, %v1037
        %v1056 = vunpack.c.l.b16 %v1017
        %v1057 = vunpack.c.l.b16 %v1018
        %v1058 = vunpack.c.l.b16 %v1019
        %v1059 = vunpack.c.l.b16 %v1020
        %v1060 = vunpack.c.l.b16 %v1021
        %v1061 = vunpack.c.l.b16 %v1022
        %v1062 = vunpack.c.l.b16 %v1023
        %v1063 = vunpack.c.l.b16 %v1024
        %v1064 = vunpack.c.l.b16 %v1025
        %v1065 = vunpack.c.l.b16 %v1026
        %v1066 = vunpack.c.l.b16 %v1027
        %v1067 = vunpack.c.l.b16 %v1028
        %v1068 = vunpack.c.l.b16 %v1029
        %v1069 = vunpack.c.l.b16 %v1030
        %v1070 = vunpack.c.l.b16 %v1031
        %v1071 = vunpack.c.l.b16 %v1032
        %v1072 = vpack.c.b16 %v1057, %v1056
        %v1073 = vpack.c.b16 %v1059, %v1058
        %v1074 = vpack.c.b16 %v1061, %v1060
        %v1075 = vpack.c.b16 %v1063, %v1062
        %v1076 = vpack.c.b16 %v1065, %v1064
        %v1077 = vpack.c.b16 %v1067, %v1066
        %v1078 = vpack.c.b16 %v1069, %v1068
        %v1079 = vpack.c.b16 %v1071, %v1070
        %1088 = vmatprep.subr.bf16.mxu0 0
        %1089 = vmatpush1.bf16.msra.mxu0 %v1079
        %1090 = vmatprep.subr.bf16.mxu0 0
        %1091 = vmatpush1.bf16.msra.mxu0 %v1078
        %1092 = vmatprep.subr.bf16.mxu0 0
        %1093 = vmatpush1.bf16.msra.mxu0 %v1077
        %1094 = vmatprep.subr.bf16.mxu0 0
        %1095 = vmatpush1.bf16.msra.mxu0 %v1076
        %1096 = vmatprep.subr.bf16.mxu0 0
        %1097 = vmatpush1.bf16.msra.mxu0 %v1075
        %1098 = vmatprep.subr.bf16.mxu0 0
        %1099 = vmatpush1.bf16.msra.mxu0 %v1074
        %1100 = vmatprep.subr.bf16.mxu0 0
        %1101 = vmatpush1.bf16.msra.mxu0 %v1073
        %1102 = vmatprep.subr.bf16.mxu0 0
        %1103 = vmatpush1.bf16.msra.mxu0 %v1072
        %1104 = vmatprep.subr.bf16.mxu0 0
        %1105 = vmatpush2.bf16.msra.mxu0 0
        %1106 = vmatprep.subr.bf16.mxu0 0
        %1107 = vmatpush2.bf16.msra.mxu0 0
        %1108 = vmatprep.subr.bf16.mxu0 0
        %1109 = vmatpush2.bf16.msra.mxu0 0
        %1110 = vmatprep.subr.bf16.mxu0 0
        %1111 = vmatpush2.bf16.msra.mxu0 0
        %1112 = vmatprep.subr.bf16.mxu0 0
        %1113 = vmatpush2.bf16.msra.mxu0 0
        %1114 = vmatprep.subr.bf16.mxu0 0
        %1115 = vmatpush2.bf16.msra.mxu0 0
        %1116 = vmatprep.subr.bf16.mxu0 0
        %1117 = vmatpush2.bf16.msra.mxu0 0
        %1118 = vmatprep.subr.bf16.mxu0 0
        %1119 = vmatpush2.bf16.msra.mxu0 0
        %1120 = vmatprep.mubr.bf16.mxu0 0
        %1121 = vmatmul.mubr.bf16.gmra.mxu0 %v654
        %v1122 = vpop.f32.mrf.mxu0
        %v1123 = vadd.f32 %v1038, %v1122
        %v1124 = vpop.f32.mrf.mxu0
        %v1125 = vpop.f32.mrf.mxu0
        %v1126 = vadd.f32 %v1038, %v1125
        %v1127 = vpop.f32.mrf.mxu0
        %1128 = vdwg.mxu0
        %v1129 = vadd.f32 %v1015, %v1123
        %v1130 = vadd.f32 %v1016, %v1126
        %v1131 = vmax.f32 %v1129, 0.0
        %v1132 = vmax.f32 %v1130, 0.0
        %1133 = vst [vmem:[#allocation2 + $0x8] sm:$0xff] %v1131
        %1134 = vst [vmem:[#allocation2 + $0x10] sm:$0xff] %v1132
        %v1135 = vld [vmem:[#allocation2 + $0x6] sm:$0xff]
        %v1136 = vld [vmem:[#allocation2 + $0xe] sm:$0xff]
        %v1137 = vpack.c.bf16 %v1136, %v1135
        %v1138 = vpack.c.bf16 %v1132, %v1131
        %v1139 = vld [vmem:[#allocation13] sm:$0xf]
        %v1140 = vld [vmem:[#allocation13 + $0x4] sm:$0xf]
        %v1141 = vld [vmem:[#allocation13 + $0x8] sm:$0xf]
        %v1142 = vld [vmem:[#allocation13 + $0xc] sm:$0xf]
        %v1143 = vld [vmem:[#allocation13 + $0x10] sm:$0xf]
        %v1144 = vld [vmem:[#allocation13 + $0x14] sm:$0xf]
        %v1145 = vld [vmem:[#allocation13 + $0x18] sm:$0xf]
        %v1146 = vld [vmem:[#allocation13 + $0x1c] sm:$0xf]
        %v1147 = vld [vmem:[#allocation13 + $0x20] sm:$0xf]
        %v1148 = vld [vmem:[#allocation13 + $0x24] sm:$0xf]
        %v1149 = vld [vmem:[#allocation13 + $0x28] sm:$0xf]
        %v1150 = vld [vmem:[#allocation13 + $0x2c] sm:$0xf]
        %v1151 = vld [vmem:[#allocation13 + $0x30] sm:$0xf]
        %v1152 = vld [vmem:[#allocation13 + $0x34] sm:$0xf]
        %v1153 = vld [vmem:[#allocation13 + $0x38] sm:$0xf]
        %v1154 = vld [vmem:[#allocation13 + $0x3c] sm:$0xf]
        %v1155 = vld [vmem:[#allocation13 + $0x40] sm:$0xf]
        %v1156 = vld [vmem:[#allocation13 + $0x44] sm:$0xf]
        %v1157 = vld [vmem:[#allocation13 + $0x48] sm:$0xf]
        %v1158 = vld [vmem:[#allocation13 + $0x4c] sm:$0xf]
        %v1159 = vld [vmem:[#allocation13 + $0x50] sm:$0xf]
        %v1160 = vld [vmem:[#allocation13 + $0x54] sm:$0xf]
        %v1161 = vld [vmem:[#allocation13 + $0x58] sm:$0xf]
        %v1162 = vld [vmem:[#allocation13 + $0x5c] sm:$0xf]
        %v1163 = vld [vmem:[#allocation13 + $0x60] sm:$0xf]
        %v1164 = vld [vmem:[#allocation13 + $0x64] sm:$0xf]
        %v1165 = vld [vmem:[#allocation13 + $0x68] sm:$0xf]
        %v1166 = vld [vmem:[#allocation13 + $0x6c] sm:$0xf]
        %v1167 = vld [vmem:[#allocation13 + $0x70] sm:$0xf]
        %v1168 = vld [vmem:[#allocation13 + $0x74] sm:$0xf]
        %v1169 = vld [vmem:[#allocation13 + $0x78] sm:$0xf]
        %v1170 = vld [vmem:[#allocation13 + $0x7c] sm:$0xf]
        %v1171 = vld [vmem:[#allocation14] sm:$0x1]
        %v1173 = vlaneseq
        %v1174 = vshrl.u32 %v1173, 7
        %v1175 = vsub.s32 0, %v1174
        %v1176 = vrot.slane %v1171, %v1175
        %v1210 = vunpack.c.l.b16 %v1139
        %v1211 = vunpack.c.l.b16 %v1140
        %v1212 = vunpack.c.l.b16 %v1141
        %v1213 = vunpack.c.l.b16 %v1142
        %v1214 = vunpack.c.l.b16 %v1143
        %v1215 = vunpack.c.l.b16 %v1144
        %v1216 = vunpack.c.l.b16 %v1145
        %v1217 = vunpack.c.l.b16 %v1146
        %v1218 = vunpack.c.l.b16 %v1147
        %v1219 = vunpack.c.l.b16 %v1148
        %v1220 = vunpack.c.l.b16 %v1149
        %v1221 = vunpack.c.l.b16 %v1150
        %v1222 = vunpack.c.l.b16 %v1151
        %v1223 = vunpack.c.l.b16 %v1152
        %v1224 = vunpack.c.l.b16 %v1153
        %v1225 = vunpack.c.l.b16 %v1154
        %v1226 = vunpack.c.l.b16 %v1155
        %v1227 = vunpack.c.l.b16 %v1156
        %v1228 = vunpack.c.l.b16 %v1157
        %v1229 = vunpack.c.l.b16 %v1158
        %v1230 = vunpack.c.l.b16 %v1159
        %v1231 = vunpack.c.l.b16 %v1160
        %v1232 = vunpack.c.l.b16 %v1161
        %v1233 = vunpack.c.l.b16 %v1162
        %v1234 = vunpack.c.l.b16 %v1163
        %v1235 = vunpack.c.l.b16 %v1164
        %v1236 = vunpack.c.l.b16 %v1165
        %v1237 = vunpack.c.l.b16 %v1166
        %v1238 = vunpack.c.l.b16 %v1167
        %v1239 = vunpack.c.l.b16 %v1168
        %v1240 = vunpack.c.l.b16 %v1169
        %v1241 = vunpack.c.l.b16 %v1170
        %v1242 = vpack.c.b16 %v1211, %v1210
        %v1243 = vpack.c.b16 %v1213, %v1212
        %v1244 = vpack.c.b16 %v1215, %v1214
        %v1245 = vpack.c.b16 %v1217, %v1216
        %v1246 = vpack.c.b16 %v1219, %v1218
        %v1247 = vpack.c.b16 %v1221, %v1220
        %v1248 = vpack.c.b16 %v1223, %v1222
        %v1249 = vpack.c.b16 %v1225, %v1224
        %v1250 = vpack.c.b16 %v1227, %v1226
        %v1251 = vpack.c.b16 %v1229, %v1228
        %v1252 = vpack.c.b16 %v1231, %v1230
        %v1253 = vpack.c.b16 %v1233, %v1232
        %v1254 = vpack.c.b16 %v1235, %v1234
        %v1255 = vpack.c.b16 %v1237, %v1236
        %v1256 = vpack.c.b16 %v1239, %v1238
        %v1257 = vpack.c.b16 %v1241, %v1240
        %1274 = vmatprep.subr.bf16.mxu0 0
        %1275 = vmatpush1.bf16.msra.mxu0 %v1249
        %1276 = vmatprep.subr.bf16.mxu0 0
        %1277 = vmatpush1.bf16.msra.mxu0 %v1248
        %1278 = vmatprep.subr.bf16.mxu0 0
        %1279 = vmatpush1.bf16.msra.mxu0 %v1247
        %1280 = vmatprep.subr.bf16.mxu0 0
        %1281 = vmatpush1.bf16.msra.mxu0 %v1246
        %1282 = vmatprep.subr.bf16.mxu0 0
        %1283 = vmatpush1.bf16.msra.mxu0 %v1245
        %1284 = vmatprep.subr.bf16.mxu0 0
        %1285 = vmatpush1.bf16.msra.mxu0 %v1244
        %1286 = vmatprep.subr.bf16.mxu0 0
        %1287 = vmatpush1.bf16.msra.mxu0 %v1243
        %1288 = vmatprep.subr.bf16.mxu0 0
        %1289 = vmatpush1.bf16.msra.mxu0 %v1242
        %1290 = vmatprep.subr.bf16.mxu0 0
        %1291 = vmatpush2.bf16.msra.mxu0 %v1257
        %1292 = vmatprep.subr.bf16.mxu0 0
        %1293 = vmatpush2.bf16.msra.mxu0 %v1256
        %1294 = vmatprep.subr.bf16.mxu0 0
        %1295 = vmatpush2.bf16.msra.mxu0 %v1255
        %1296 = vmatprep.subr.bf16.mxu0 0
        %1297 = vmatpush2.bf16.msra.mxu0 %v1254
        %1298 = vmatprep.subr.bf16.mxu0 0
        %1299 = vmatpush2.bf16.msra.mxu0 %v1253
        %1300 = vmatprep.subr.bf16.mxu0 0
        %1301 = vmatpush2.bf16.msra.mxu0 %v1252
        %1302 = vmatprep.subr.bf16.mxu0 0
        %1303 = vmatpush2.bf16.msra.mxu0 %v1251
        %1304 = vmatprep.subr.bf16.mxu0 0
        %1305 = vmatpush2.bf16.msra.mxu0 %v1250
        %1306 = vmatprep.mubr.bf16.mxu0 %v1138
        %1307 = vmatmul.mubr.bf16.gmra.mxu0 %v1137
        %v1308 = vpop.f32.mrf.mxu0
        %v1309 = vadd.f32 %v1176, %v1308
        %v1310 = vpop.f32.mrf.mxu0
        %v1311 = vpop.f32.mrf.mxu0
        %v1312 = vadd.f32 %v1176, %v1311
        %v1313 = vpop.f32.mrf.mxu0
        %1314 = vdwg.mxu0
        %v1315 = vmax.f32 %v1309, 0.0
        %v1316 = vmax.f32 %v1312, 0.0
        %1317 = vst [vmem:[#allocation2 + $0x8] sm:$0xff] %v1315
        %1318 = vst [vmem:[#allocation2 + $0x10] sm:$0xff] %v1316
        %v1319 = vld [vmem:[#allocation2 + $0x6] sm:$0xff]
        %v1320 = vld [vmem:[#allocation2 + $0xe] sm:$0xff]
        %v1321 = vpack.c.bf16 %v1320, %v1319
        %v1322 = vpack.c.bf16 %v1316, %v1315
        %v1323 = vld [vmem:[#allocation16] sm:$0xf]
        %v1324 = vld [vmem:[#allocation16 + $0x4] sm:$0xf]
        %v1325 = vld [vmem:[#allocation16 + $0x8] sm:$0xf]
        %v1326 = vld [vmem:[#allocation16 + $0xc] sm:$0xf]
        %v1327 = vld [vmem:[#allocation16 + $0x10] sm:$0xf]
        %v1328 = vld [vmem:[#allocation16 + $0x14] sm:$0xf]
        %v1329 = vld [vmem:[#allocation16 + $0x18] sm:$0xf]
        %v1330 = vld [vmem:[#allocation16 + $0x1c] sm:$0xf]
        %v1331 = vld [vmem:[#allocation16 + $0x20] sm:$0xf]
        %v1332 = vld [vmem:[#allocation16 + $0x24] sm:$0xf]
        %v1333 = vld [vmem:[#allocation16 + $0x28] sm:$0xf]
        %v1334 = vld [vmem:[#allocation16 + $0x2c] sm:$0xf]
        %v1335 = vld [vmem:[#allocation16 + $0x30] sm:$0xf]
        %v1336 = vld [vmem:[#allocation16 + $0x34] sm:$0xf]
        %v1337 = vld [vmem:[#allocation16 + $0x38] sm:$0xf]
        %v1338 = vld [vmem:[#allocation16 + $0x3c] sm:$0xf]
        %v1339 = vld [vmem:[#allocation16 + $0x40] sm:$0xf]
        %v1340 = vld [vmem:[#allocation16 + $0x44] sm:$0xf]
        %v1341 = vld [vmem:[#allocation16 + $0x48] sm:$0xf]
        %v1342 = vld [vmem:[#allocation16 + $0x4c] sm:$0xf]
        %v1343 = vld [vmem:[#allocation16 + $0x50] sm:$0xf]
        %v1344 = vld [vmem:[#allocation16 + $0x54] sm:$0xf]
        %v1345 = vld [vmem:[#allocation16 + $0x58] sm:$0xf]
        %v1346 = vld [vmem:[#allocation16 + $0x5c] sm:$0xf]
        %v1347 = vld [vmem:[#allocation16 + $0x60] sm:$0xf]
        %v1348 = vld [vmem:[#allocation16 + $0x64] sm:$0xf]
        %v1349 = vld [vmem:[#allocation16 + $0x68] sm:$0xf]
        %v1350 = vld [vmem:[#allocation16 + $0x6c] sm:$0xf]
        %v1351 = vld [vmem:[#allocation16 + $0x70] sm:$0xf]
        %v1352 = vld [vmem:[#allocation16 + $0x74] sm:$0xf]
        %v1353 = vld [vmem:[#allocation16 + $0x78] sm:$0xf]
        %v1354 = vld [vmem:[#allocation16 + $0x7c] sm:$0xf]
        %v1355 = vld [vmem:[#allocation17] sm:$0x1]
        %v1357 = vlaneseq
        %v1358 = vshrl.u32 %v1357, 7
        %v1359 = vsub.s32 0, %v1358
        %v1360 = vrot.slane %v1355, %v1359
        %v1394 = vunpack.c.l.b16 %v1323
        %v1395 = vunpack.c.l.b16 %v1324
        %v1396 = vunpack.c.l.b16 %v1325
        %v1397 = vunpack.c.l.b16 %v1326
        %v1398 = vunpack.c.l.b16 %v1327
        %v1399 = vunpack.c.l.b16 %v1328
        %v1400 = vunpack.c.l.b16 %v1329
        %v1401 = vunpack.c.l.b16 %v1330
        %v1402 = vunpack.c.l.b16 %v1331
        %v1403 = vunpack.c.l.b16 %v1332
        %v1404 = vunpack.c.l.b16 %v1333
        %v1405 = vunpack.c.l.b16 %v1334
        %v1406 = vunpack.c.l.b16 %v1335
        %v1407 = vunpack.c.l.b16 %v1336
        %v1408 = vunpack.c.l.b16 %v1337
        %v1409 = vunpack.c.l.b16 %v1338
        %v1410 = vunpack.c.l.b16 %v1339
        %v1411 = vunpack.c.l.b16 %v1340
        %v1412 = vunpack.c.l.b16 %v1341
        %v1413 = vunpack.c.l.b16 %v1342
        %v1414 = vunpack.c.l.b16 %v1343
        %v1415 = vunpack.c.l.b16 %v1344
        %v1416 = vunpack.c.l.b16 %v1345
        %v1417 = vunpack.c.l.b16 %v1346
        %v1418 = vunpack.c.l.b16 %v1347
        %v1419 = vunpack.c.l.b16 %v1348
        %v1420 = vunpack.c.l.b16 %v1349
        %v1421 = vunpack.c.l.b16 %v1350
        %v1422 = vunpack.c.l.b16 %v1351
        %v1423 = vunpack.c.l.b16 %v1352
        %v1424 = vunpack.c.l.b16 %v1353
        %v1425 = vunpack.c.l.b16 %v1354
        %v1426 = vpack.c.b16 %v1395, %v1394
        %v1427 = vpack.c.b16 %v1397, %v1396
        %v1428 = vpack.c.b16 %v1399, %v1398
        %v1429 = vpack.c.b16 %v1401, %v1400
        %v1430 = vpack.c.b16 %v1403, %v1402
        %v1431 = vpack.c.b16 %v1405, %v1404
        %v1432 = vpack.c.b16 %v1407, %v1406
        %v1433 = vpack.c.b16 %v1409, %v1408
        %v1434 = vpack.c.b16 %v1411, %v1410
        %v1435 = vpack.c.b16 %v1413, %v1412
        %v1436 = vpack.c.b16 %v1415, %v1414
        %v1437 = vpack.c.b16 %v1417, %v1416
        %v1438 = vpack.c.b16 %v1419, %v1418
        %v1439 = vpack.c.b16 %v1421, %v1420
        %v1440 = vpack.c.b16 %v1423, %v1422
        %v1441 = vpack.c.b16 %v1425, %v1424
        %1458 = vmatprep.subr.bf16.mxu0 0
        %1459 = vmatpush1.bf16.msra.mxu0 %v1433
        %1460 = vmatprep.subr.bf16.mxu0 0
        %1461 = vmatpush1.bf16.msra.mxu0 %v1432
        %1462 = vmatprep.subr.bf16.mxu0 0
        %1463 = vmatpush1.bf16.msra.mxu0 %v1431
        %1464 = vmatprep.subr.bf16.mxu0 0
        %1465 = vmatpush1.bf16.msra.mxu0 %v1430
        %1466 = vmatprep.subr.bf16.mxu0 0
        %1467 = vmatpush1.bf16.msra.mxu0 %v1429
        %1468 = vmatprep.subr.bf16.mxu0 0
        %1469 = vmatpush1.bf16.msra.mxu0 %v1428
        %1470 = vmatprep.subr.bf16.mxu0 0
        %1471 = vmatpush1.bf16.msra.mxu0 %v1427
        %1472 = vmatprep.subr.bf16.mxu0 0
        %1473 = vmatpush1.bf16.msra.mxu0 %v1426
        %1474 = vmatprep.subr.bf16.mxu0 0
        %1475 = vmatpush2.bf16.msra.mxu0 %v1441
        %1476 = vmatprep.subr.bf16.mxu0 0
        %1477 = vmatpush2.bf16.msra.mxu0 %v1440
        %1478 = vmatprep.subr.bf16.mxu0 0
        %1479 = vmatpush2.bf16.msra.mxu0 %v1439
        %1480 = vmatprep.subr.bf16.mxu0 0
        %1481 = vmatpush2.bf16.msra.mxu0 %v1438
        %1482 = vmatprep.subr.bf16.mxu0 0
        %1483 = vmatpush2.bf16.msra.mxu0 %v1437
        %1484 = vmatprep.subr.bf16.mxu0 0
        %1485 = vmatpush2.bf16.msra.mxu0 %v1436
        %1486 = vmatprep.subr.bf16.mxu0 0
        %1487 = vmatpush2.bf16.msra.mxu0 %v1435
        %1488 = vmatprep.subr.bf16.mxu0 0
        %1489 = vmatpush2.bf16.msra.mxu0 %v1434
        %1490 = vmatprep.mubr.bf16.mxu0 %v1322
        %1491 = vmatmul.mubr.bf16.gmra.mxu0 %v1321
        %v1492 = vpop.f32.mrf.mxu0
        %v1493 = vadd.f32 %v1360, %v1492
        %v1494 = vpop.f32.mrf.mxu0
        %v1495 = vpop.f32.mrf.mxu0
        %v1496 = vadd.f32 %v1360, %v1495
        %v1497 = vpop.f32.mrf.mxu0
        %1498 = vdwg.mxu0
        %v1499 = vmax.f32 %v1493, 0.0
        %v1500 = vmax.f32 %v1496, 0.0
        %v1501 = vadd.f32 %v1499, %v1131
        %v1502 = vadd.f32 %v1500, %v1132
        %v1503 = vmax.f32 %v1501, 0.0
        %v1504 = vmax.f32 %v1502, 0.0
        %1505 = vst [vmem:[#allocation2 + $0x8] sm:$0xff] %v1503
        %1506 = vst [vmem:[#allocation2 + $0x10] sm:$0xff] %v1504
        %v1507 = vld [vmem:[#allocation2 + $0x4] sm:$0xff]
        %v1508 = vld [vmem:[#allocation2 + $0xc] sm:$0xff]
        %v1509 = vpack.c.bf16 %v1508, %v1507
        %v1510 = vpack.c.bf16 %v1504, %v1503
        %v1511 = vld [vmem:[#allocation19] sm:$0xf]
        %v1512 = vld [vmem:[#allocation19 + $0x4] sm:$0xf]
        %v1513 = vld [vmem:[#allocation19 + $0x8] sm:$0xf]
        %v1514 = vld [vmem:[#allocation19 + $0xc] sm:$0xf]
        %v1515 = vld [vmem:[#allocation19 + $0x10] sm:$0xf]
        %v1516 = vld [vmem:[#allocation19 + $0x14] sm:$0xf]
        %v1517 = vld [vmem:[#allocation19 + $0x18] sm:$0xf]
        %v1518 = vld [vmem:[#allocation19 + $0x1c] sm:$0xf]
        %v1519 = vld [vmem:[#allocation19 + $0x20] sm:$0xf]
        %v1520 = vld [vmem:[#allocation19 + $0x24] sm:$0xf]
        %v1521 = vld [vmem:[#allocation19 + $0x28] sm:$0xf]
        %v1522 = vld [vmem:[#allocation19 + $0x2c] sm:$0xf]
        %v1523 = vld [vmem:[#allocation19 + $0x30] sm:$0xf]
        %v1524 = vld [vmem:[#allocation19 + $0x34] sm:$0xf]
        %v1525 = vld [vmem:[#allocation19 + $0x38] sm:$0xf]
        %v1526 = vld [vmem:[#allocation19 + $0x3c] sm:$0xf]
        %v1527 = vld [vmem:[#allocation19 + $0x40] sm:$0xf]
        %v1528 = vld [vmem:[#allocation19 + $0x44] sm:$0xf]
        %v1529 = vld [vmem:[#allocation19 + $0x48] sm:$0xf]
        %v1530 = vld [vmem:[#allocation19 + $0x4c] sm:$0xf]
        %v1531 = vld [vmem:[#allocation19 + $0x50] sm:$0xf]
        %v1532 = vld [vmem:[#allocation19 + $0x54] sm:$0xf]
        %v1533 = vld [vmem:[#allocation19 + $0x58] sm:$0xf]
        %v1534 = vld [vmem:[#allocation19 + $0x5c] sm:$0xf]
        %v1535 = vld [vmem:[#allocation19 + $0x60] sm:$0xf]
        %v1536 = vld [vmem:[#allocation19 + $0x64] sm:$0xf]
        %v1537 = vld [vmem:[#allocation19 + $0x68] sm:$0xf]
        %v1538 = vld [vmem:[#allocation19 + $0x6c] sm:$0xf]
        %v1539 = vld [vmem:[#allocation19 + $0x70] sm:$0xf]
        %v1540 = vld [vmem:[#allocation19 + $0x74] sm:$0xf]
        %v1541 = vld [vmem:[#allocation19 + $0x78] sm:$0xf]
        %v1542 = vld [vmem:[#allocation19 + $0x7c] sm:$0xf]
        %v1543 = vld [vmem:[%s12] sm:$0x1]
        %v1545 = vlaneseq
        %v1546 = vshrl.u32 %v1545, 7
        %v1547 = vsub.s32 0, %v1546
        %v1548 = vrot.slane %v1543, %v1547
        %v1582 = vunpack.c.l.b16 %v1511
        %v1583 = vunpack.c.l.b16 %v1512
        %v1584 = vunpack.c.l.b16 %v1513
        %v1585 = vunpack.c.l.b16 %v1514
        %v1586 = vunpack.c.l.b16 %v1515
        %v1587 = vunpack.c.l.b16 %v1516
        %v1588 = vunpack.c.l.b16 %v1517
        %v1589 = vunpack.c.l.b16 %v1518
        %v1590 = vunpack.c.l.b16 %v1519
        %v1591 = vunpack.c.l.b16 %v1520
        %v1592 = vunpack.c.l.b16 %v1521
        %v1593 = vunpack.c.l.b16 %v1522
        %v1594 = vunpack.c.l.b16 %v1523
        %v1595 = vunpack.c.l.b16 %v1524
        %v1596 = vunpack.c.l.b16 %v1525
        %v1597 = vunpack.c.l.b16 %v1526
        %v1598 = vunpack.c.l.b16 %v1527
        %v1599 = vunpack.c.l.b16 %v1528
        %v1600 = vunpack.c.l.b16 %v1529
        %v1601 = vunpack.c.l.b16 %v1530
        %v1602 = vunpack.c.l.b16 %v1531
        %v1603 = vunpack.c.l.b16 %v1532
        %v1604 = vunpack.c.l.b16 %v1533
        %v1605 = vunpack.c.l.b16 %v1534
        %v1606 = vunpack.c.l.b16 %v1535
        %v1607 = vunpack.c.l.b16 %v1536
        %v1608 = vunpack.c.l.b16 %v1537
        %v1609 = vunpack.c.l.b16 %v1538
        %v1610 = vunpack.c.l.b16 %v1539
        %v1611 = vunpack.c.l.b16 %v1540
        %v1612 = vunpack.c.l.b16 %v1541
        %v1613 = vunpack.c.l.b16 %v1542
        %v1614 = vpack.c.b16 %v1583, %v1582
        %v1615 = vpack.c.b16 %v1585, %v1584
        %v1616 = vpack.c.b16 %v1587, %v1586
        %v1617 = vpack.c.b16 %v1589, %v1588
        %v1618 = vpack.c.b16 %v1591, %v1590
        %v1619 = vpack.c.b16 %v1593, %v1592
        %v1620 = vpack.c.b16 %v1595, %v1594
        %v1621 = vpack.c.b16 %v1597, %v1596
        %v1622 = vpack.c.b16 %v1599, %v1598
        %v1623 = vpack.c.b16 %v1601, %v1600
        %v1624 = vpack.c.b16 %v1603, %v1602
        %v1625 = vpack.c.b16 %v1605, %v1604
        %v1626 = vpack.c.b16 %v1607, %v1606
        %v1627 = vpack.c.b16 %v1609, %v1608
        %v1628 = vpack.c.b16 %v1611, %v1610
        %v1629 = vpack.c.b16 %v1613, %v1612
        %1646 = vmatprep.subr.bf16.mxu0 0
        %1647 = vmatpush1.bf16.msra.mxu0 %v1621
        %1648 = vmatprep.subr.bf16.mxu0 0
        %1649 = vmatpush1.bf16.msra.mxu0 %v1620
        %1650 = vmatprep.subr.bf16.mxu0 0
        %1651 = vmatpush1.bf16.msra.mxu0 %v1619
        %1652 = vmatprep.subr.bf16.mxu0 0
        %1653 = vmatpush1.bf16.msra.mxu0 %v1618
        %1654 = vmatprep.subr.bf16.mxu0 0
        %1655 = vmatpush1.bf16.msra.mxu0 %v1617
        %1656 = vmatprep.subr.bf16.mxu0 0
        %1657 = vmatpush1.bf16.msra.mxu0 %v1616
        %1658 = vmatprep.subr.bf16.mxu0 0
        %1659 = vmatpush1.bf16.msra.mxu0 %v1615
        %1660 = vmatprep.subr.bf16.mxu0 0
        %1661 = vmatpush1.bf16.msra.mxu0 %v1614
        %1662 = vmatprep.subr.bf16.mxu0 0
        %1663 = vmatpush2.bf16.msra.mxu0 %v1629
        %1664 = vmatprep.subr.bf16.mxu0 0
        %1665 = vmatpush2.bf16.msra.mxu0 %v1628
        %1666 = vmatprep.subr.bf16.mxu0 0
        %1667 = vmatpush2.bf16.msra.mxu0 %v1627
        %1668 = vmatprep.subr.bf16.mxu0 0
        %1669 = vmatpush2.bf16.msra.mxu0 %v1626
        %1670 = vmatprep.subr.bf16.mxu0 0
        %1671 = vmatpush2.bf16.msra.mxu0 %v1625
        %1672 = vmatprep.subr.bf16.mxu0 0
        %1673 = vmatpush2.bf16.msra.mxu0 %v1624
        %1674 = vmatprep.subr.bf16.mxu0 0
        %1675 = vmatpush2.bf16.msra.mxu0 %v1623
        %1676 = vmatprep.subr.bf16.mxu0 0
        %1677 = vmatpush2.bf16.msra.mxu0 %v1622
        %1678 = vmatprep.mubr.bf16.mxu0 %v1510
        %1679 = vmatmul.mubr.bf16.gmra.mxu0 %v1509
        %v1680 = vpop.f32.mrf.mxu0
        %v1681 = vadd.f32 %v1548, %v1680
        %v1682 = vpop.f32.mrf.mxu0
        %v1683 = vpop.f32.mrf.mxu0
        %v1684 = vadd.f32 %v1548, %v1683
        %v1685 = vpop.f32.mrf.mxu0
        %1686 = vdwg.mxu0
        %v1687 = vmax.f32 %v1681, 0.0
        %v1688 = vmax.f32 %v1684, 0.0
        %1689 = vst [vmem:[#allocation2 + $0x8] sm:$0xff] %v1687
        %1690 = vst [vmem:[#allocation2 + $0x10] sm:$0xff] %v1688
        %v1691 = vld [vmem:[#allocation2 + $0x4] sm:$0xff]
        %v1692 = vld [vmem:[#allocation2 + $0xc] sm:$0xff]
        %v1693 = vpack.c.bf16 %v1692, %v1691
        %v1694 = vpack.c.bf16 %v1688, %v1687
        %v1695 = vld [vmem:[%s13] sm:$0xf]
        %v1696 = vld [vmem:[%s13 + $0x4] sm:$0xf]
        %v1697 = vld [vmem:[%s13 + $0x8] sm:$0xf]
        %v1698 = vld [vmem:[%s13 + $0xc] sm:$0xf]
        %v1699 = vld [vmem:[%s13 + $0x10] sm:$0xf]
        %v1700 = vld [vmem:[%s13 + $0x14] sm:$0xf]
        %v1701 = vld [vmem:[%s13 + $0x18] sm:$0xf]
        %v1702 = vld [vmem:[%s13 + $0x1c] sm:$0xf]
        %v1703 = vld [vmem:[%s13 + $0x20] sm:$0xf]
        %v1704 = vld [vmem:[%s13 + $0x24] sm:$0xf]
        %v1705 = vld [vmem:[%s13 + $0x28] sm:$0xf]
        %v1706 = vld [vmem:[%s13 + $0x2c] sm:$0xf]
        %v1707 = vld [vmem:[%s13 + $0x30] sm:$0xf]
        %v1708 = vld [vmem:[%s13 + $0x34] sm:$0xf]
        %v1709 = vld [vmem:[%s13 + $0x38] sm:$0xf]
        %v1710 = vld [vmem:[%s13 + $0x3c] sm:$0xf]
        %v1711 = vld [vmem:[%s13 + $0x40] sm:$0xf]
        %v1712 = vld [vmem:[%s13 + $0x44] sm:$0xf]
        %v1713 = vld [vmem:[%s13 + $0x48] sm:$0xf]
        %v1714 = vld [vmem:[%s13 + $0x4c] sm:$0xf]
        %v1715 = vld [vmem:[%s13 + $0x50] sm:$0xf]
        %v1716 = vld [vmem:[%s13 + $0x54] sm:$0xf]
        %v1717 = vld [vmem:[%s13 + $0x58] sm:$0xf]
        %v1718 = vld [vmem:[%s13 + $0x5c] sm:$0xf]
        %v1719 = vld [vmem:[%s13 + $0x60] sm:$0xf]
        %v1720 = vld [vmem:[%s13 + $0x64] sm:$0xf]
        %v1721 = vld [vmem:[%s13 + $0x68] sm:$0xf]
        %v1722 = vld [vmem:[%s13 + $0x6c] sm:$0xf]
        %v1723 = vld [vmem:[%s13 + $0x70] sm:$0xf]
        %v1724 = vld [vmem:[%s13 + $0x74] sm:$0xf]
        %v1725 = vld [vmem:[%s13 + $0x78] sm:$0xf]
        %v1726 = vld [vmem:[%s13 + $0x7c] sm:$0xf]
        %v1727 = vld [vmem:[%s14] sm:$0x1]
        %v1729 = vlaneseq
        %v1730 = vshrl.u32 %v1729, 7
        %v1731 = vsub.s32 0, %v1730
        %v1732 = vrot.slane %v1727, %v1731
        %v1766 = vunpack.c.l.b16 %v1695
        %v1767 = vunpack.c.l.b16 %v1696
        %v1768 = vunpack.c.l.b16 %v1697
        %v1769 = vunpack.c.l.b16 %v1698
        %v1770 = vunpack.c.l.b16 %v1699
        %v1771 = vunpack.c.l.b16 %v1700
        %v1772 = vunpack.c.l.b16 %v1701
        %v1773 = vunpack.c.l.b16 %v1702
        %v1774 = vunpack.c.l.b16 %v1703
        %v1775 = vunpack.c.l.b16 %v1704
        %v1776 = vunpack.c.l.b16 %v1705
        %v1777 = vunpack.c.l.b16 %v1706
        %v1778 = vunpack.c.l.b16 %v1707
        %v1779 = vunpack.c.l.b16 %v1708
        %v1780 = vunpack.c.l.b16 %v1709
        %v1781 = vunpack.c.l.b16 %v1710
        %v1782 = vunpack.c.l.b16 %v1711
        %v1783 = vunpack.c.l.b16 %v1712
        %v1784 = vunpack.c.l.b16 %v1713
        %v1785 = vunpack.c.l.b16 %v1714
        %v1786 = vunpack.c.l.b16 %v1715
        %v1787 = vunpack.c.l.b16 %v1716
        %v1788 = vunpack.c.l.b16 %v1717
        %v1789 = vunpack.c.l.b16 %v1718
        %v1790 = vunpack.c.l.b16 %v1719
        %v1791 = vunpack.c.l.b16 %v1720
        %v1792 = vunpack.c.l.b16 %v1721
        %v1793 = vunpack.c.l.b16 %v1722
        %v1794 = vunpack.c.l.b16 %v1723
        %v1795 = vunpack.c.l.b16 %v1724
        %v1796 = vunpack.c.l.b16 %v1725
        %v1797 = vunpack.c.l.b16 %v1726
        %v1798 = vpack.c.b16 %v1767, %v1766
        %v1799 = vpack.c.b16 %v1769, %v1768
        %v1800 = vpack.c.b16 %v1771, %v1770
        %v1801 = vpack.c.b16 %v1773, %v1772
        %v1802 = vpack.c.b16 %v1775, %v1774
        %v1803 = vpack.c.b16 %v1777, %v1776
        %v1804 = vpack.c.b16 %v1779, %v1778
        %v1805 = vpack.c.b16 %v1781, %v1780
        %v1806 = vpack.c.b16 %v1783, %v1782
        %v1807 = vpack.c.b16 %v1785, %v1784
        %v1808 = vpack.c.b16 %v1787, %v1786
        %v1809 = vpack.c.b16 %v1789, %v1788
        %v1810 = vpack.c.b16 %v1791, %v1790
        %v1811 = vpack.c.b16 %v1793, %v1792
        %v1812 = vpack.c.b16 %v1795, %v1794
        %v1813 = vpack.c.b16 %v1797, %v1796
        %1830 = vmatprep.subr.bf16.mxu0 0
        %1831 = vmatpush1.bf16.msra.mxu0 %v1805
        %1832 = vmatprep.subr.bf16.mxu0 0
        %1833 = vmatpush1.bf16.msra.mxu0 %v1804
        %1834 = vmatprep.subr.bf16.mxu0 0
        %1835 = vmatpush1.bf16.msra.mxu0 %v1803
        %1836 = vmatprep.subr.bf16.mxu0 0
        %1837 = vmatpush1.bf16.msra.mxu0 %v1802
        %1838 = vmatprep.subr.bf16.mxu0 0
        %1839 = vmatpush1.bf16.msra.mxu0 %v1801
        %1840 = vmatprep.subr.bf16.mxu0 0
        %1841 = vmatpush1.bf16.msra.mxu0 %v1800
        %1842 = vmatprep.subr.bf16.mxu0 0
        %1843 = vmatpush1.bf16.msra.mxu0 %v1799
        %1844 = vmatprep.subr.bf16.mxu0 0
        %1845 = vmatpush1.bf16.msra.mxu0 %v1798
        %1846 = vmatprep.subr.bf16.mxu0 0
        %1847 = vmatpush2.bf16.msra.mxu0 %v1813
        %1848 = vmatprep.subr.bf16.mxu0 0
        %1849 = vmatpush2.bf16.msra.mxu0 %v1812
        %1850 = vmatprep.subr.bf16.mxu0 0
        %1851 = vmatpush2.bf16.msra.mxu0 %v1811
        %1852 = vmatprep.subr.bf16.mxu0 0
        %1853 = vmatpush2.bf16.msra.mxu0 %v1810
        %1854 = vmatprep.subr.bf16.mxu0 0
        %1855 = vmatpush2.bf16.msra.mxu0 %v1809
        %1856 = vmatprep.subr.bf16.mxu0 0
        %1857 = vmatpush2.bf16.msra.mxu0 %v1808
        %1858 = vmatprep.subr.bf16.mxu0 0
        %1859 = vmatpush2.bf16.msra.mxu0 %v1807
        %1860 = vmatprep.subr.bf16.mxu0 0
        %1861 = vmatpush2.bf16.msra.mxu0 %v1806
        %1862 = vmatprep.mubr.bf16.mxu0 %v1694
        %1863 = vmatmul.mubr.bf16.gmra.mxu0 %v1693
        %v1864 = vpop.f32.mrf.mxu0
        %v1865 = vadd.f32 %v1732, %v1864
        %v1866 = vpop.f32.mrf.mxu0
        %v1867 = vpop.f32.mrf.mxu0
        %v1868 = vadd.f32 %v1732, %v1867
        %v1869 = vpop.f32.mrf.mxu0
        %1870 = vdwg.mxu0
        %v1871 = vmax.f32 %v1865, 0.0
        %v1872 = vmax.f32 %v1868, 0.0
        %v1873 = vadd.f32 %v1871, %v1503
        %v1874 = vadd.f32 %v1872, %v1504
        %v1875 = vmax.f32 %v1873, 0.0
        %v1876 = vmax.f32 %v1874, 0.0
        %1877 = vst [vmem:[%s644] sm:$0xff] %v1875
        %1878 = vst [vmem:[%s644 + $0x8] sm:$0xff] %v1876
        %p1879 = scmp.lt.s32.totalorder %s32, 1
        %s1880 = scalar_select %p1879, %s32, 1
        %s1881 = smul.addr %s1880, 2
        %s1882 = smul.addr %s1881, 8
        %s1883 = scalar_lea.vmem %s15, %s1882
        // Predicated region
        $region125: #{_lambda_.1} parent=79 // pred_check
          %p1884 = pneg %p370
        $region126: #{_lambda_.1} parent=79 // pred_check_branch
          %1886 = sbr.rel (%p1884) target = $region128
        $region127: #{_lambda_.1} parent=79 // pred_region
          _
        $region128: #{_lambda_.1} parent=79 // pred_fallthru
          _
      $region80: #{_lambda_.1} parent=5 // pred_fallthru
        _
      %p1887 = scmp.le.s32.totalorder 2, %s27
      // Predicated region
      $region129: #{_lambda_.1} parent=5 // pred_check
        %p1888 = pneg %p1887
      $region130: #{_lambda_.1} parent=5 // pred_check_branch
        %1890 = sbr.rel (%p1888) target = $region132
      $region131: #{_lambda_.1} parent=5 // pred_region
        %s1891 = ssub.s32 %s27, 2
        // Predicated region
        $region133: #{_lambda_.1} parent=131 // pred_check
          %p1892 = pneg %p376
        $region134: #{_lambda_.1} parent=131 // pred_check_branch
          %1894 = sbr.rel (%p1892) target = $region136
        $region135: #{_lambda_.1} parent=131 // pred_region
          %p1895 = scmp.lt.s32.totalorder %s33, 1
          %s1896 = scalar_select %p1895, %s33, 1
          %s1897 = smul.addr %s1896, 2
          %s1898 = smul.addr %s1897, 8
          %s1899 = scalar_lea.vmem %s15, %s1898
        $region136: #{_lambda_.1} parent=131 // pred_fallthru
          _
      $region132: #{_lambda_.1} parent=5 // pred_fallthru
        _
    $region6: #{_lambda_.1} parent=1 // loop_footer
      %s31 = sadd.s32 1, %s27
    $region7: #{_lambda_.1} parent=1 // loop_footer_branch
      %26 = sbr.rel target = $region3
    $region8: #{_lambda_.1} parent=1 // loop_exit
      _
    %1900 = vsyncpa [#allocation4], 1
    %s1901 = scalar_lea.sflag [#allocation4], 1
    %1902 = vsyncpa %s1901, 1
    %1903 = vsyncpa [#allocation6], 1
    %1904 = vsyncpa [#allocation9], 1
    %1905 = vsyncpa [#allocation12], 1
    %1906 = vsyncpa [#allocation15], 1
    %1907 = vsyncpa [#allocation18], 1

</llo_original>
